<compile_context>
chip_gen: v5e
topology: v5e:2x2
jax: 0.10.0
libtpu: 0.0.40
codegen_flags: <defaults>
</compile_context>

<pallas_src>
import functools

import jax
import jax.numpy as jnp
from jax import lax
from jax.experimental import pallas as pl
from jax.experimental.pallas import tpu as pltpu


# ---------------------------------------------------------------------------
# in-kernel helpers
# ---------------------------------------------------------------------------
def _layernorm(x, g, b, eps=1e-5):
    mu = jnp.mean(x, axis=-1, keepdims=True)
    var = jnp.mean(jnp.square(x - mu), axis=-1, keepdims=True)
    return (x - mu) * lax.rsqrt(var + eps) * g + b


def _leaky(x):  # F.leaky_relu(x, 0.05)
    return jnp.where(x > 0, x, 0.05 * x)


def _mm(a, b):  # bf16 x bf16 MXU matmul with f32 accumulation
    return jnp.dot(a.astype(jnp.bfloat16), b, preferred_element_type=jnp.float32)


def _slab_layout(F, D, align=16):
    """Row layout of the packed bf16 weight slab (matrices stacked along rows,
    each row-offset aligned to the bf16 sublane-pack of 16)."""
    shapes = [(F, D), (3 * D, 2 * D), (D, 64), (64, 16), (16, 8), (8, 1)]
    offs, r = [], 0
    for rows, _ in shapes:
        offs.append(r)
        r += -(-rows // align) * align
    return shapes, tuple(offs), r


# ---------------------------------------------------------------------------
# kernel: whole linDisc forward for a block of `Bb` batch elements
# ---------------------------------------------------------------------------
def lin_disc_kernel(x_ref, wslab_ref, vec_ref, o_ref, *, D):
    Bb, T, F = x_ref.shape
    T1, T2 = T // 8, T // 32
    M = Bb * T
    _, offs, _ = _slab_layout(F, D)
    o1, ohc, o2, o3, o4, o5 = offs

    # packed small params: (18, wmax) f32
    vec = vec_ref[...]
    b1, g1, be1 = vec[0:1, :D], vec[1:2, :D], vec[2:3, :D]
    bhc = vec[3:4, :2 * D]
    gh1, bh1 = vec[4:5, :D], vec[5:6, :D]
    gh2, bh2 = vec[6:7, :D], vec[7:8, :D]
    b2, g2, be2 = vec[8:9, :64], vec[9:10, :64], vec[10:11, :64]
    b3, g3, be3 = vec[11:12, :16], vec[12:13, :16], vec[13:14, :16]
    b4, g4, be4 = vec[14:15, :8], vec[15:16, :8], vec[16:17, :8]
    b5 = vec[17:18, :1]

    # ---- conv1 (1x1) + LayerNorm; batch folded into the matmul M dimension ----
    x2 = x_ref[...].reshape(M, F)                                    # bf16
    h = _layernorm(_mm(x2, wslab_ref[o1:o1 + F, :D]) + b1, g1, be1)  # (M, D) f32
    # dp1: identity (eval)

    # ---- highwayConv (k=3, dilation=1, "same") --------------------------------
    # Shifted copies via XLU rolls on the flattened (M, D) view; row 0 of h_prev
    # and row T-1 of h_next (per batch element) are masked to zero, so taps
    # neither wrap around time nor leak across batch elements.
    tpos = lax.broadcasted_iota(jnp.int32, (Bb, T, D), 1).reshape(M, D)
    h_prev = jnp.where(tpos == 0, 0.0, pltpu.roll(h, 1, 0))          # h[t-1]
    h_next = jnp.where(tpos == T - 1, 0.0, pltpu.roll(h, M - 1, 0))  # h[t+1]

    # six taps = three accumulated K=D matmuls into one [H1 | H2] accumulator
    hh = (_mm(h_prev, wslab_ref[ohc:ohc + D, :2 * D])
          + _mm(h, wslab_ref[ohc + D:ohc + 2 * D, :2 * D])
          + _mm(h_next, wslab_ref[ohc + 2 * D:ohc + 3 * D, :2 * D])
          + bhc)                                                     # (M, 2D)
    H1 = _layernorm(hh[:, :D], gh1, bh1)
    H2 = _layernorm(hh[:, D:], gh2, bh2)
    sig = jax.nn.sigmoid(H1)
    hw = h + sig * (H2 - h)                  # == sig*H2 + (1-sig)*h
    # hc.dp: identity (eval)

    # ---- AvgPool1d(8) commuted in front of conv2 (both linear) ----------------
    hw_p = jnp.mean(hw.reshape(Bb * T1, 8, D), axis=1)               # (Bb*T1, D)
    z = _mm(hw_p, wslab_ref[o2:o2 + D, :64]) + b2                    # (Bb*T1, 64)
    z = _leaky(_layernorm(z, g2, be2))
    # dp2: identity (eval)

    # ---- AvgPool1d(4) commuted in front of conv3 ------------------------------
    z = jnp.mean(z.reshape(Bb * T2, 4, 64), axis=1)                  # (Bb*T2, 64)
    z = _layernorm(_mm(z, wslab_ref[o3:o3 + 64, :16]) + b3, g3, be3) # (Bb*T2, 16)

    # ---- conv4(leaky) + ln4 ----------------------------------------------------
    z = _layernorm(_mm(_leaky(z), wslab_ref[o4:o4 + 16, :8]) + b4, g4, be4)

    # ---- AdaptiveAvgPool1d(1) commuted in front of conv5 (both linear) + sigmoid
    zf = jnp.mean(_leaky(z).reshape(Bb, T2, 8), axis=1)              # (Bb, 8)
    logit = _mm(zf, wslab_ref[o5:o5 + 8, :1]) + b5                   # (Bb, 1)
    o_ref[...] = jax.nn.sigmoid(logit).reshape(Bb, 1, 1)


# ---------------------------------------------------------------------------
# wrapper
# ---------------------------------------------------------------------------
def _tensorcores_per_chip():
    """2 TensorCores on megacore (v4/v5p) and v7x parts; 1 on v5e/v6e."""
    try:
        kind = jax.devices()[0].device_kind.lower()
    except Exception:
        return 1
    return 2 if any(t in kind for t in ("v4", "v5p", "v7", "7x")) else 1


def _pick_batch_block(B, T, n_tc, target_rows=2048):
    """Fold enough batch elements into M to fill the MXU / make DMA granules
    worthwhile; only force >= 2 grid steps on parts with 2 TensorCores."""
    bb = max(1, min(B, target_rows // max(T, 1)))
    if n_tc > 1 and B > 1:
        bb = min(bb, max(1, B // 2))
    while B % bb:
        bb -= 1
    return bb


def lin_disc_pallas(x_nct, params, *, batch_block=None):
    """x_nct: (B, freq_bins, T) float32 (PyTorch NCT).  Returns (B, 1, 1) f32."""
    (w1, b1, g1, be1, wh10, wh11, wh12, bh1c, wh20, wh21, wh22, bh2c,
     gh1, bh1, gh2, bh2, w2, b2, g2, be2, w3, b3, g3, be3,
     w4, b4, g4, be4, w5, b5) = params

    B, F, T = x_nct.shape
    D = w1.shape[1]
    assert T % 32 == 0, "T must be divisible by 8*4 for the two average pools"

    # bf16 channels-last input: the kernel only uses x as a bf16 matmul operand,
    # so this halves the largest HBM->VMEM DMA at no extra accuracy cost.
    # TODO(synk): for very long T, skip this transpose and feed native (B,F,T)
    # with an in-kernel contraction over F to avoid the extra HBM round trip.
    x_ntc = jnp.transpose(x_nct, (0, 2, 1)).astype(jnp.bfloat16)     # (B, T, F)

    # Fuse the six highway taps into one (3D, 2D) weight producing [H1 | H2].
    whc = jnp.concatenate(
        [jnp.concatenate([wh10, wh20], axis=1),
         jnp.concatenate([wh11, wh21], axis=1),
         jnp.concatenate([wh12, wh22], axis=1)], axis=0)             # (3D, 2D)
    bhc = jnp.concatenate([bh1c, bh2c], axis=1)                      # (1, 2D)

    # Pack all six weight matrices into a single bf16 slab (one ref / DMA).
    shapes, offs, total_rows = _slab_layout(F, D)
    lane_w = max(2 * D, 64)
    mats = [w1, whc, w2, w3, w4, w5]
    slab = jnp.zeros((total_rows, lane_w), jnp.float32)
    for (r, c), off, m in zip(shapes, offs, mats):
        assert m.shape == (r, c)
        slab = slab.at[off:off + r, :c].set(m.astype(jnp.float32))
    wslab = slab.astype(jnp.bfloat16)

    # Pack all tiny (1, N) vectors (biases / LN gammas / betas) into one f32 array.
    wmax = max(2 * D, 64)
    pad_row = lambda v: jnp.pad(v.astype(jnp.float32),
                                ((0, 0), (0, wmax - v.shape[1])))
    vecs = jnp.concatenate(
        [pad_row(v) for v in (b1, g1, be1, bhc, gh1, bh1, gh2, bh2,
                              b2, g2, be2, b3, g3, be3, b4, g4, be4, b5)],
        axis=0)                                                      # (18, wmax)

    n_tc = _tensorcores_per_chip()
    Bb = batch_block or _pick_batch_block(B, T, n_tc)
    grid = (B // Bb,)
    # TODO(synk): when B == 1 on a 2-TensorCore part (v7x), add a second parallel
    # grid axis over T-chunks (roll+mask halos at chunk edges) so both TCs work.

    # Per-step VMEM footprint -> explicit scoped-vmem limit (v5e default is 16 MiB).
    est = (2 * (Bb * T * F * 2 + total_rows * lane_w * 2 + 18 * wmax * 4)
           + 10 * Bb * T * D * 4 + (1 << 20))
    vmem_limit = int(min(max(est, 32 << 20), 56 << 20))

    full = lambda a: pl.BlockSpec(a.shape, lambda b: (0,) * a.ndim)
    out = pl.pallas_call(
        functools.partial(lin_disc_kernel, D=D),
        out_shape=jax.ShapeDtypeStruct((B, 1, 1), jnp.float32),
        grid=grid,
        in_specs=[pl.BlockSpec((Bb, T, F), lambda b: (b, 0, 0)),
                  full(wslab), full(vecs)],
        out_specs=pl.BlockSpec((Bb, 1, 1), lambda b: (b, 0, 0)),
        compiler_params=pltpu.CompilerParams(
            dimension_semantics=("parallel",),
            vmem_limit_bytes=vmem_limit),
    )(x_ntc, wslab, vecs)
    return out


# ---------------------------------------------------------------------------
# pure-JAX f32 reference (same math / layout as the PyTorch module)
# ---------------------------------------------------------------------------
def lin_disc_reference(x_nct, params):
    (w1, b1, g1, be1, wh10, wh11, wh12, bh1c, wh20, wh21, wh22, bh2c,
     gh1, bh1, gh2, bh2, w2, b2, g2, be2, w3, b3, g3, be3,
     w4, b4, g4, be4, w5, b5) = params

    def ln(v, g, b, eps=1e-5):
        mu = v.mean(-1, keepdims=True)
        var = ((v - mu) ** 2).mean(-1, keepdims=True)
        return (v - mu) / jnp.sqrt(var + eps) * g + b

    leaky = lambda v: jnp.where(v > 0, v, 0.05 * v)

    x = jnp.transpose(x_nct, (0, 2, 1))                 # (B, T, F)
    h = ln(x @ w1 + b1, g1, be1)                        # (B, T, D)
    h_prev = jnp.pad(h, ((0, 0), (1, 0), (0, 0)))[:, :-1]
    h_next = jnp.pad(h, ((0, 0), (0, 1), (0, 0)))[:, 1:]
    H1 = ln(h_prev @ wh10 + h @ wh11 + h_next @ wh12 + bh1c, gh1, bh1)
    H2 = ln(h_prev @ wh20 + h @ wh21 + h_next @ wh22 + bh2c, gh2, bh2)
    s = jax.nn.sigmoid(H1)
    hw = s * H2 + (1 - s) * h

    z = hw @ w2 + b2
    B, T, _ = z.shape
    z = z.reshape(B, T // 8, 8, -1).mean(2)
    z = leaky(ln(z, g2, be2))
    z = z @ w3 + b3
    z = z.reshape(B, z.shape[1] // 4, 4, -1).mean(2)
    z = ln(z, g3, be3)
    z = ln(leaky(z) @ w4 + b4, g4, be4)
    z = leaky(z) @ w5 + b5
    return jax.nn.sigmoid(z.mean(1, keepdims=True))     # (B, 1, 1)


# ---------------------------------------------------------------------------
# deterministic parameter construction (synthetic; conv weights stored (in,out))
# ---------------------------------------------------------------------------
def make_params(key, freq_bins, disc_dim):
    D = disc_dim
    ks = jax.random.split(key, 32)
    n = lambda k, shape, s=0.1: s * jax.random.normal(k, shape, jnp.float32)

    params = [
        n(ks[0], (freq_bins, D)), n(ks[1], (1, D)),                 # conv1 W, b
        1.0 + n(ks[2], (1, D)), n(ks[3], (1, D)),                   # ln1 gamma, beta
        n(ks[4], (D, D)), n(ks[5], (D, D)), n(ks[6], (D, D)),       # hc taps -> H1
        n(ks[7], (1, D)),                                           # hc bias (H1 half)
        n(ks[8], (D, D)), n(ks[9], (D, D)), n(ks[10], (D, D)),      # hc taps -> H2
        n(ks[11], (1, D)),                                          # hc bias (H2 half)
        1.0 + n(ks[12], (1, D)), n(ks[13], (1, D)),                 # hc ln1
        1.0 + n(ks[14], (1, D)), n(ks[15], (1, D)),                 # hc ln2
        n(ks[16], (D, 64)), n(ks[17], (1, 64)),                     # conv2
        1.0 + n(ks[18], (1, 64)), n(ks[19], (1, 64)),               # ln2
        n(ks[20], (64, 16)), n(ks[21], (1, 16)),                    # conv3
        1.0 + n(ks[22], (1, 16)), n(ks[23], (1, 16)),               # ln3
        n(ks[24], (16, 8)), n(ks[25], (1, 8)),                      # conv4
        1.0 + n(ks[26], (1, 8)), n(ks[27], (1, 8)),                 # ln4
        n(ks[28], (8, 1)), n(ks[29], (1, 1)),                       # conv5
    ]
    return params


if __name__ == "__main__":
    B, FREQ_BINS, DISC_DIM, T = 2, 16, 32, 64   # T divisible by 8*4 for the avg pools

    key = jax.random.PRNGKey(0)
    k_x, k_p = jax.random.split(key)
    x = jax.random.normal(k_x, (B, FREQ_BINS, T), jnp.float32)   # PyTorch (B, C, T)
    params = make_params(k_p, FREQ_BINS, DISC_DIM)

    out = jax.block_until_ready(lin_disc_pallas(x, params))
    ref = jax.block_until_ready(lin_disc_reference(x, params))

    assert out.shape == (B, 1, 1)
    # Kernel uses bf16 matmul operands (f32 accumulation) and reorders linear ops
    # (pool/conv commute), so compare against the all-f32 reference with a
    # bf16-appropriate tolerance.
    assert jnp.allclose(out, ref, atol=2e-2, rtol=2e-2), (out, ref)

    print("KERNEL_OK")
</pallas_src>

<mosaic_0001>
module attributes {stable_mosaic.version = 11 : i64} {
  func.func @lin_disc_kernel(%arg0: i32, %arg1: memref<2x64x16xbf16, #tpu.memory_space<vmem>>, %arg2: memref<240x64xbf16, #tpu.memory_space<vmem>>, %arg3: memref<18x64xf32, #tpu.memory_space<vmem>>, %arg4: memref<2x1x1xf32, #tpu.memory_space<vmem>>) attributes {dimension_semantics = [#tpu.dimension_semantics<parallel>], iteration_bounds = array<i64: 1>, scalar_prefetch = 0 : i64, scratch_operands = 0 : i64, tpu.core_type = #tpu.core_type<tc>, window_params = [{transform_indices = @transform_0, window_bounds = array<i64: 2, 64, 16>}, {pipeline_mode = #tpu.pipeline_mode<synchronous>, transform_indices = @transform_1, window_bounds = array<i64: 240, 64>}, {pipeline_mode = #tpu.pipeline_mode<synchronous>, transform_indices = @transform_2, window_bounds = array<i64: 18, 64>}, {transform_indices = @transform_3, window_bounds = array<i64: 2, 1, 1>}]} {
    %c0 = arith.constant 0 : index
    %c0_0 = arith.constant 0 : index
    %0 = vector.load %arg3[%c0, %c0_0] : memref<18x64xf32, #tpu.memory_space<vmem>>, vector<18x64xf32>
    %1 = vector.extract_strided_slice %0 {offsets = [0, 0], sizes = [1, 32], strides = [1, 1]} : vector<18x64xf32> to vector<1x32xf32>
    %2 = vector.extract_strided_slice %0 {offsets = [1, 0], sizes = [1, 32], strides = [1, 1]} : vector<18x64xf32> to vector<1x32xf32>
    %3 = vector.extract_strided_slice %0 {offsets = [2, 0], sizes = [1, 32], strides = [1, 1]} : vector<18x64xf32> to vector<1x32xf32>
    %4 = vector.extract_strided_slice %0 {offsets = [3, 0], sizes = [1, 64], strides = [1, 1]} : vector<18x64xf32> to vector<1x64xf32>
    %5 = vector.extract_strided_slice %0 {offsets = [4, 0], sizes = [1, 32], strides = [1, 1]} : vector<18x64xf32> to vector<1x32xf32>
    %6 = vector.extract_strided_slice %0 {offsets = [5, 0], sizes = [1, 32], strides = [1, 1]} : vector<18x64xf32> to vector<1x32xf32>
    %7 = vector.extract_strided_slice %0 {offsets = [6, 0], sizes = [1, 32], strides = [1, 1]} : vector<18x64xf32> to vector<1x32xf32>
    %8 = vector.extract_strided_slice %0 {offsets = [7, 0], sizes = [1, 32], strides = [1, 1]} : vector<18x64xf32> to vector<1x32xf32>
    %9 = vector.extract_strided_slice %0 {offsets = [8, 0], sizes = [1, 64], strides = [1, 1]} : vector<18x64xf32> to vector<1x64xf32>
    %10 = vector.extract_strided_slice %0 {offsets = [9, 0], sizes = [1, 64], strides = [1, 1]} : vector<18x64xf32> to vector<1x64xf32>
    %11 = vector.extract_strided_slice %0 {offsets = [10, 0], sizes = [1, 64], strides = [1, 1]} : vector<18x64xf32> to vector<1x64xf32>
    %12 = vector.extract_strided_slice %0 {offsets = [11, 0], sizes = [1, 16], strides = [1, 1]} : vector<18x64xf32> to vector<1x16xf32>
    %13 = vector.extract_strided_slice %0 {offsets = [12, 0], sizes = [1, 16], strides = [1, 1]} : vector<18x64xf32> to vector<1x16xf32>
    %14 = vector.extract_strided_slice %0 {offsets = [13, 0], sizes = [1, 16], strides = [1, 1]} : vector<18x64xf32> to vector<1x16xf32>
    %15 = vector.extract_strided_slice %0 {offsets = [14, 0], sizes = [1, 8], strides = [1, 1]} : vector<18x64xf32> to vector<1x8xf32>
    %16 = vector.extract_strided_slice %0 {offsets = [15, 0], sizes = [1, 8], strides = [1, 1]} : vector<18x64xf32> to vector<1x8xf32>
    %17 = vector.extract_strided_slice %0 {offsets = [16, 0], sizes = [1, 8], strides = [1, 1]} : vector<18x64xf32> to vector<1x8xf32>
    %18 = vector.extract_strided_slice %0 {offsets = [17, 0], sizes = [1, 1], strides = [1, 1]} : vector<18x64xf32> to vector<1x1xf32>
    %c0_1 = arith.constant 0 : index
    %c0_2 = arith.constant 0 : index
    %c0_3 = arith.constant 0 : index
    %19 = vector.load %arg1[%c0_1, %c0_2, %c0_3] : memref<2x64x16xbf16, #tpu.memory_space<vmem>>, vector<2x64x16xbf16>
    %20 = vector.shape_cast %19 : vector<2x64x16xbf16> to vector<128x16xbf16>
    %c0_4 = arith.constant 0 : index
    %c0_5 = arith.constant 0 : index
    %21 = vector.load %arg2[%c0_4, %c0_5] : memref<240x64xbf16, #tpu.memory_space<vmem>>, vector<16x32xbf16>
    %cst = arith.constant dense<0.000000e+00> : vector<128x32xf32>
    %22 = tpu.matmul %20, %21, %cst {dimension_numbers = #tpu.dot_dimension_numbers<[1], [0], [0], [1], [0, 0, 1, 1], [], []>} : vector<128x16xbf16>, vector<16x32xbf16>, vector<128x32xf32> -> vector<128x32xf32>
    %23 = vector.broadcast %1 : vector<1x32xf32> to vector<128x32xf32>
    %24 = arith.addf %22, %23 : vector<128x32xf32>
    %cst_6 = arith.constant dense<0.000000e+00> : vector<128xf32>
    %25 = vector.multi_reduction <add>, %24, %cst_6 [1] : vector<128x32xf32> to vector<128xf32>
    %26 = vector.shape_cast %25 : vector<128xf32> to vector<128x1xf32>
    %cst_7 = arith.constant 3.200000e+01 : f32
    %27 = vector.broadcast %cst_7 : f32 to vector<128x1xf32>
    %28 = arith.divf %26, %27 : vector<128x1xf32>
    %29 = vector.broadcast %28 : vector<128x1xf32> to vector<128x32xf32>
    %30 = arith.subf %24, %29 : vector<128x32xf32>
    %31 = arith.mulf %30, %30 : vector<128x32xf32>
    %cst_8 = arith.constant dense<0.000000e+00> : vector<128xf32>
    %32 = vector.multi_reduction <add>, %31, %cst_8 [1] : vector<128x32xf32> to vector<128xf32>
    %33 = vector.shape_cast %32 : vector<128xf32> to vector<128x1xf32>
    %cst_9 = arith.constant 3.200000e+01 : f32
    %34 = vector.broadcast %cst_9 : f32 to vector<128x1xf32>
    %35 = arith.divf %33, %34 : vector<128x1xf32>
    %36 = vector.broadcast %28 : vector<128x1xf32> to vector<128x32xf32>
    %37 = arith.subf %24, %36 : vector<128x32xf32>
    %cst_10 = arith.constant 9.99999974E-6 : f32
    %38 = vector.broadcast %cst_10 : f32 to vector<128x1xf32>
    %39 = arith.addf %35, %38 : vector<128x1xf32>
    %40 = math.rsqrt %39 : vector<128x1xf32>
    %41 = vector.broadcast %40 : vector<128x1xf32> to vector<128x32xf32>
    %42 = arith.mulf %37, %41 : vector<128x32xf32>
    %43 = vector.broadcast %2 : vector<1x32xf32> to vector<128x32xf32>
    %44 = arith.mulf %42, %43 : vector<128x32xf32>
    %45 = vector.broadcast %3 : vector<1x32xf32> to vector<128x32xf32>
    %46 = arith.addf %44, %45 : vector<128x32xf32>
    %47 = tpu.iota {dimensions = array<i32: 1>} : vector<2x64x32xi32>
    %48 = vector.shape_cast %47 : vector<2x64x32xi32> to vector<128x32xi32>
    %c0_i32 = arith.constant 0 : i32
    %49 = vector.broadcast %c0_i32 : i32 to vector<128x32xi32>
    %50 = arith.cmpi eq, %48, %49 : vector<128x32xi32>
    %c1_i32 = arith.constant 1 : i32
    %51 = tpu.dynamic_rotate %46 by %c1_i32 dim 0 : vector<128x32xf32>, i32 -> vector<128x32xf32>
    %cst_11 = arith.constant 0.000000e+00 : f32
    %52 = vector.broadcast %cst_11 : f32 to vector<128x32xf32>
    %53 = arith.select %50, %52, %51 : vector<128x32xi1>, vector<128x32xf32>
    %c63_i32 = arith.constant 63 : i32
    %54 = vector.broadcast %c63_i32 : i32 to vector<128x32xi32>
    %55 = arith.cmpi eq, %48, %54 : vector<128x32xi32>
    %c127_i32 = arith.constant 127 : i32
    %56 = tpu.dynamic_rotate %46 by %c127_i32 dim 0 : vector<128x32xf32>, i32 -> vector<128x32xf32>
    %cst_12 = arith.constant 0.000000e+00 : f32
    %57 = vector.broadcast %cst_12 : f32 to vector<128x32xf32>
    %58 = arith.select %55, %57, %56 : vector<128x32xi1>, vector<128x32xf32>
    %c16 = arith.constant 16 : index
    %c0_13 = arith.constant 0 : index
    %59 = vector.load %arg2[%c16, %c0_13] : memref<240x64xbf16, #tpu.memory_space<vmem>>, vector<32x64xbf16>
    %60 = arith.truncf %53 : vector<128x32xf32> to vector<128x32xbf16>
    %cst_14 = arith.constant dense<0.000000e+00> : vector<128x64xf32>
    %61 = tpu.matmul %60, %59, %cst_14 {dimension_numbers = #tpu.dot_dimension_numbers<[1], [0], [0], [1], [0, 0, 1, 1], [], []>} : vector<128x32xbf16>, vector<32x64xbf16>, vector<128x64xf32> -> vector<128x64xf32>
    %c48 = arith.constant 48 : index
    %c0_15 = arith.constant 0 : index
    %62 = vector.load %arg2[%c48, %c0_15] : memref<240x64xbf16, #tpu.memory_space<vmem>>, vector<32x64xbf16>
    %63 = arith.truncf %46 : vector<128x32xf32> to vector<128x32xbf16>
    %cst_16 = arith.constant dense<0.000000e+00> : vector<128x64xf32>
    %64 = tpu.matmul %63, %62, %cst_16 {dimension_numbers = #tpu.dot_dimension_numbers<[1], [0], [0], [1], [0, 0, 1, 1], [], []>} : vector<128x32xbf16>, vector<32x64xbf16>, vector<128x64xf32> -> vector<128x64xf32>
    %65 = arith.addf %61, %64 : vector<128x64xf32>
    %c80 = arith.constant 80 : index
    %c0_17 = arith.constant 0 : index
    %66 = vector.load %arg2[%c80, %c0_17] : memref<240x64xbf16, #tpu.memory_space<vmem>>, vector<32x64xbf16>
    %67 = arith.truncf %58 : vector<128x32xf32> to vector<128x32xbf16>
    %cst_18 = arith.constant dense<0.000000e+00> : vector<128x64xf32>
    %68 = tpu.matmul %67, %66, %cst_18 {dimension_numbers = #tpu.dot_dimension_numbers<[1], [0], [0], [1], [0, 0, 1, 1], [], []>} : vector<128x32xbf16>, vector<32x64xbf16>, vector<128x64xf32> -> vector<128x64xf32>
    %69 = arith.addf %65, %68 : vector<128x64xf32>
    %70 = vector.broadcast %4 : vector<1x64xf32> to vector<128x64xf32>
    %71 = arith.addf %69, %70 : vector<128x64xf32>
    %72 = vector.extract_strided_slice %71 {offsets = [0, 0], sizes = [128, 32], strides = [1, 1]} : vector<128x64xf32> to vector<128x32xf32>
    %cst_19 = arith.constant dense<0.000000e+00> : vector<128xf32>
    %73 = vector.multi_reduction <add>, %72, %cst_19 [1] : vector<128x32xf32> to vector<128xf32>
    %74 = vector.shape_cast %73 : vector<128xf32> to vector<128x1xf32>
    %cst_20 = arith.constant 3.200000e+01 : f32
    %75 = vector.broadcast %cst_20 : f32 to vector<128x1xf32>
    %76 = arith.divf %74, %75 : vector<128x1xf32>
    %77 = vector.broadcast %76 : vector<128x1xf32> to vector<128x32xf32>
    %78 = arith.subf %72, %77 : vector<128x32xf32>
    %79 = arith.mulf %78, %78 : vector<128x32xf32>
    %cst_21 = arith.constant dense<0.000000e+00> : vector<128xf32>
    %80 = vector.multi_reduction <add>, %79, %cst_21 [1] : vector<128x32xf32> to vector<128xf32>
    %81 = vector.shape_cast %80 : vector<128xf32> to vector<128x1xf32>
    %cst_22 = arith.constant 3.200000e+01 : f32
    %82 = vector.broadcast %cst_22 : f32 to vector<128x1xf32>
    %83 = arith.divf %81, %82 : vector<128x1xf32>
    %84 = vector.broadcast %76 : vector<128x1xf32> to vector<128x32xf32>
    %85 = arith.subf %72, %84 : vector<128x32xf32>
    %cst_23 = arith.constant 9.99999974E-6 : f32
    %86 = vector.broadcast %cst_23 : f32 to vector<128x1xf32>
    %87 = arith.addf %83, %86 : vector<128x1xf32>
    %88 = math.rsqrt %87 : vector<128x1xf32>
    %89 = vector.broadcast %88 : vector<128x1xf32> to vector<128x32xf32>
    %90 = arith.mulf %85, %89 : vector<128x32xf32>
    %91 = vector.broadcast %5 : vector<1x32xf32> to vector<128x32xf32>
    %92 = arith.mulf %90, %91 : vector<128x32xf32>
    %93 = vector.broadcast %6 : vector<1x32xf32> to vector<128x32xf32>
    %94 = arith.addf %92, %93 : vector<128x32xf32>
    %95 = vector.extract_strided_slice %71 {offsets = [0, 32], sizes = [128, 32], strides = [1, 1]} : vector<128x64xf32> to vector<128x32xf32>
    %cst_24 = arith.constant dense<0.000000e+00> : vector<128xf32>
    %96 = vector.multi_reduction <add>, %95, %cst_24 [1] : vector<128x32xf32> to vector<128xf32>
    %97 = vector.shape_cast %96 : vector<128xf32> to vector<128x1xf32>
    %cst_25 = arith.constant 3.200000e+01 : f32
    %98 = vector.broadcast %cst_25 : f32 to vector<128x1xf32>
    %99 = arith.divf %97, %98 : vector<128x1xf32>
    %100 = vector.broadcast %99 : vector<128x1xf32> to vector<128x32xf32>
    %101 = arith.subf %95, %100 : vector<128x32xf32>
    %102 = arith.mulf %101, %101 : vector<128x32xf32>
    %cst_26 = arith.constant dense<0.000000e+00> : vector<128xf32>
    %103 = vector.multi_reduction <add>, %102, %cst_26 [1] : vector<128x32xf32> to vector<128xf32>
    %104 = vector.shape_cast %103 : vector<128xf32> to vector<128x1xf32>
    %cst_27 = arith.constant 3.200000e+01 : f32
    %105 = vector.broadcast %cst_27 : f32 to vector<128x1xf32>
    %106 = arith.divf %104, %105 : vector<128x1xf32>
    %107 = vector.broadcast %99 : vector<128x1xf32> to vector<128x32xf32>
    %108 = arith.subf %95, %107 : vector<128x32xf32>
    %cst_28 = arith.constant 9.99999974E-6 : f32
    %109 = vector.broadcast %cst_28 : f32 to vector<128x1xf32>
    %110 = arith.addf %106, %109 : vector<128x1xf32>
    %111 = math.rsqrt %110 : vector<128x1xf32>
    %112 = vector.broadcast %111 : vector<128x1xf32> to vector<128x32xf32>
    %113 = arith.mulf %108, %112 : vector<128x32xf32>
    %114 = vector.broadcast %7 : vector<1x32xf32> to vector<128x32xf32>
    %115 = arith.mulf %113, %114 : vector<128x32xf32>
    %116 = vector.broadcast %8 : vector<1x32xf32> to vector<128x32xf32>
    %117 = arith.addf %115, %116 : vector<128x32xf32>
    %118 = arith.negf %94 : vector<128x32xf32>
    %119 = math.exp %118 : vector<128x32xf32>
    %cst_29 = arith.constant 1.000000e+00 : f32
    %120 = vector.broadcast %cst_29 : f32 to vector<128x32xf32>
    %121 = arith.addf %120, %119 : vector<128x32xf32>
    %122 = arith.divf %120, %121 : vector<128x32xf32>
    %123 = arith.subf %117, %46 : vector<128x32xf32>
    %124 = arith.mulf %122, %123 : vector<128x32xf32>
    %125 = arith.addf %46, %124 : vector<128x32xf32>
    %126 = vector.shape_cast %125 : vector<128x32xf32> to vector<16x8x32xf32>
    %cst_30 = arith.constant dense<0.000000e+00> : vector<16x32xf32>
    %127 = vector.multi_reduction <add>, %126, %cst_30 [1] : vector<16x8x32xf32> to vector<16x32xf32>
    %cst_31 = arith.constant 8.000000e+00 : f32
    %128 = vector.broadcast %cst_31 : f32 to vector<16x32xf32>
    %129 = arith.divf %127, %128 : vector<16x32xf32>
    %c112 = arith.constant 112 : index
    %c0_32 = arith.constant 0 : index
    %130 = vector.load %arg2[%c112, %c0_32] : memref<240x64xbf16, #tpu.memory_space<vmem>>, vector<32x64xbf16>
    %131 = arith.truncf %129 : vector<16x32xf32> to vector<16x32xbf16>
    %cst_33 = arith.constant dense<0.000000e+00> : vector<16x64xf32>
    %132 = tpu.matmul %131, %130, %cst_33 {dimension_numbers = #tpu.dot_dimension_numbers<[1], [0], [0], [1], [0, 0, 1, 1], [], []>} : vector<16x32xbf16>, vector<32x64xbf16>, vector<16x64xf32> -> vector<16x64xf32>
    %133 = vector.broadcast %9 : vector<1x64xf32> to vector<16x64xf32>
    %134 = arith.addf %132, %133 : vector<16x64xf32>
    %cst_34 = arith.constant dense<0.000000e+00> : vector<16xf32>
    %135 = vector.multi_reduction <add>, %134, %cst_34 [1] : vector<16x64xf32> to vector<16xf32>
    %136 = vector.shape_cast %135 : vector<16xf32> to vector<16x1xf32>
    %cst_35 = arith.constant 6.400000e+01 : f32
    %137 = vector.broadcast %cst_35 : f32 to vector<16x1xf32>
    %138 = arith.divf %136, %137 : vector<16x1xf32>
    %139 = vector.broadcast %138 : vector<16x1xf32> to vector<16x64xf32>
    %140 = arith.subf %134, %139 : vector<16x64xf32>
    %141 = arith.mulf %140, %140 : vector<16x64xf32>
    %cst_36 = arith.constant dense<0.000000e+00> : vector<16xf32>
    %142 = vector.multi_reduction <add>, %141, %cst_36 [1] : vector<16x64xf32> to vector<16xf32>
    %143 = vector.shape_cast %142 : vector<16xf32> to vector<16x1xf32>
    %cst_37 = arith.constant 6.400000e+01 : f32
    %144 = vector.broadcast %cst_37 : f32 to vector<16x1xf32>
    %145 = arith.divf %143, %144 : vector<16x1xf32>
    %146 = vector.broadcast %138 : vector<16x1xf32> to vector<16x64xf32>
    %147 = arith.subf %134, %146 : vector<16x64xf32>
    %cst_38 = arith.constant 9.99999974E-6 : f32
    %148 = vector.broadcast %cst_38 : f32 to vector<16x1xf32>
    %149 = arith.addf %145, %148 : vector<16x1xf32>
    %150 = math.rsqrt %149 : vector<16x1xf32>
    %151 = vector.broadcast %150 : vector<16x1xf32> to vector<16x64xf32>
    %152 = arith.mulf %147, %151 : vector<16x64xf32>
    %153 = vector.broadcast %10 : vector<1x64xf32> to vector<16x64xf32>
    %154 = arith.mulf %152, %153 : vector<16x64xf32>
    %155 = vector.broadcast %11 : vector<1x64xf32> to vector<16x64xf32>
    %156 = arith.addf %154, %155 : vector<16x64xf32>
    %cst_39 = arith.constant 0.000000e+00 : f32
    %157 = vector.broadcast %cst_39 : f32 to vector<16x64xf32>
    %158 = arith.cmpf ogt, %156, %157 : vector<16x64xf32>
    %cst_40 = arith.constant 5.000000e-02 : f32
    %159 = vector.broadcast %cst_40 : f32 to vector<16x64xf32>
    %160 = arith.mulf %159, %156 : vector<16x64xf32>
    %161 = arith.select %158, %156, %160 : vector<16x64xi1>, vector<16x64xf32>
    %162 = vector.shape_cast %161 : vector<16x64xf32> to vector<4x4x64xf32>
    %cst_41 = arith.constant dense<0.000000e+00> : vector<4x64xf32>
    %163 = vector.multi_reduction <add>, %162, %cst_41 [1] : vector<4x4x64xf32> to vector<4x64xf32>
    %cst_42 = arith.constant 4.000000e+00 : f32
    %164 = vector.broadcast %cst_42 : f32 to vector<4x64xf32>
    %165 = arith.divf %163, %164 : vector<4x64xf32>
    %c144 = arith.constant 144 : index
    %c0_43 = arith.constant 0 : index
    %166 = vector.load %arg2[%c144, %c0_43] : memref<240x64xbf16, #tpu.memory_space<vmem>>, vector<64x16xbf16>
    %167 = arith.truncf %165 : vector<4x64xf32> to vector<4x64xbf16>
    %cst_44 = arith.constant dense<0.000000e+00> : vector<4x16xf32>
    %168 = tpu.matmul %167, %166, %cst_44 {dimension_numbers = #tpu.dot_dimension_numbers<[1], [0], [0], [1], [0, 0, 1, 1], [], []>} : vector<4x64xbf16>, vector<64x16xbf16>, vector<4x16xf32> -> vector<4x16xf32>
    %169 = vector.broadcast %12 : vector<1x16xf32> to vector<4x16xf32>
    %170 = arith.addf %168, %169 : vector<4x16xf32>
    %cst_45 = arith.constant dense<0.000000e+00> : vector<4xf32>
    %171 = vector.multi_reduction <add>, %170, %cst_45 [1] : vector<4x16xf32> to vector<4xf32>
    %172 = vector.shape_cast %171 : vector<4xf32> to vector<4x1xf32>
    %cst_46 = arith.constant 1.600000e+01 : f32
    %173 = vector.broadcast %cst_46 : f32 to vector<4x1xf32>
    %174 = arith.divf %172, %173 : vector<4x1xf32>
    %175 = vector.broadcast %174 : vector<4x1xf32> to vector<4x16xf32>
    %176 = arith.subf %170, %175 : vector<4x16xf32>
    %177 = arith.mulf %176, %176 : vector<4x16xf32>
    %cst_47 = arith.constant dense<0.000000e+00> : vector<4xf32>
    %178 = vector.multi_reduction <add>, %177, %cst_47 [1] : vector<4x16xf32> to vector<4xf32>
    %179 = vector.shape_cast %178 : vector<4xf32> to vector<4x1xf32>
    %cst_48 = arith.constant 1.600000e+01 : f32
    %180 = vector.broadcast %cst_48 : f32 to vector<4x1xf32>
    %181 = arith.divf %179, %180 : vector<4x1xf32>
    %182 = vector.broadcast %174 : vector<4x1xf32> to vector<4x16xf32>
    %183 = arith.subf %170, %182 : vector<4x16xf32>
    %cst_49 = arith.constant 9.99999974E-6 : f32
    %184 = vector.broadcast %cst_49 : f32 to vector<4x1xf32>
    %185 = arith.addf %181, %184 : vector<4x1xf32>
    %186 = math.rsqrt %185 : vector<4x1xf32>
    %187 = vector.broadcast %186 : vector<4x1xf32> to vector<4x16xf32>
    %188 = arith.mulf %183, %187 : vector<4x16xf32>
    %189 = vector.broadcast %13 : vector<1x16xf32> to vector<4x16xf32>
    %190 = arith.mulf %188, %189 : vector<4x16xf32>
    %191 = vector.broadcast %14 : vector<1x16xf32> to vector<4x16xf32>
    %192 = arith.addf %190, %191 : vector<4x16xf32>
    %cst_50 = arith.constant 0.000000e+00 : f32
    %193 = vector.broadcast %cst_50 : f32 to vector<4x16xf32>
    %194 = arith.cmpf ogt, %192, %193 : vector<4x16xf32>
    %cst_51 = arith.constant 5.000000e-02 : f32
    %195 = vector.broadcast %cst_51 : f32 to vector<4x16xf32>
    %196 = arith.mulf %195, %192 : vector<4x16xf32>
    %197 = arith.select %194, %192, %196 : vector<4x16xi1>, vector<4x16xf32>
    %c208 = arith.constant 208 : index
    %c0_52 = arith.constant 0 : index
    %198 = vector.load %arg2[%c208, %c0_52] : memref<240x64xbf16, #tpu.memory_space<vmem>>, vector<16x8xbf16>
    %199 = arith.truncf %197 : vector<4x16xf32> to vector<4x16xbf16>
    %cst_53 = arith.constant dense<0.000000e+00> : vector<4x8xf32>
    %200 = tpu.matmul %199, %198, %cst_53 {dimension_numbers = #tpu.dot_dimension_numbers<[1], [0], [0], [1], [0, 0, 1, 1], [], []>} : vector<4x16xbf16>, vector<16x8xbf16>, vector<4x8xf32> -> vector<4x8xf32>
    %201 = vector.broadcast %15 : vector<1x8xf32> to vector<4x8xf32>
    %202 = arith.addf %200, %201 : vector<4x8xf32>
    %cst_54 = arith.constant dense<0.000000e+00> : vector<4xf32>
    %203 = vector.multi_reduction <add>, %202, %cst_54 [1] : vector<4x8xf32> to vector<4xf32>
    %204 = vector.shape_cast %203 : vector<4xf32> to vector<4x1xf32>
    %cst_55 = arith.constant 8.000000e+00 : f32
    %205 = vector.broadcast %cst_55 : f32 to vector<4x1xf32>
    %206 = arith.divf %204, %205 : vector<4x1xf32>
    %207 = vector.broadcast %206 : vector<4x1xf32> to vector<4x8xf32>
    %208 = arith.subf %202, %207 : vector<4x8xf32>
    %209 = arith.mulf %208, %208 : vector<4x8xf32>
    %cst_56 = arith.constant dense<0.000000e+00> : vector<4xf32>
    %210 = vector.multi_reduction <add>, %209, %cst_56 [1] : vector<4x8xf32> to vector<4xf32>
    %211 = vector.shape_cast %210 : vector<4xf32> to vector<4x1xf32>
    %cst_57 = arith.constant 8.000000e+00 : f32
    %212 = vector.broadcast %cst_57 : f32 to vector<4x1xf32>
    %213 = arith.divf %211, %212 : vector<4x1xf32>
    %214 = vector.broadcast %206 : vector<4x1xf32> to vector<4x8xf32>
    %215 = arith.subf %202, %214 : vector<4x8xf32>
    %cst_58 = arith.constant 9.99999974E-6 : f32
    %216 = vector.broadcast %cst_58 : f32 to vector<4x1xf32>
    %217 = arith.addf %213, %216 : vector<4x1xf32>
    %218 = math.rsqrt %217 : vector<4x1xf32>
    %219 = vector.broadcast %218 : vector<4x1xf32> to vector<4x8xf32>
    %220 = arith.mulf %215, %219 : vector<4x8xf32>
    %221 = vector.broadcast %16 : vector<1x8xf32> to vector<4x8xf32>
    %222 = arith.mulf %220, %221 : vector<4x8xf32>
    %223 = vector.broadcast %17 : vector<1x8xf32> to vector<4x8xf32>
    %224 = arith.addf %222, %223 : vector<4x8xf32>
    %cst_59 = arith.constant 0.000000e+00 : f32
    %225 = vector.broadcast %cst_59 : f32 to vector<4x8xf32>
    %226 = arith.cmpf ogt, %224, %225 : vector<4x8xf32>
    %cst_60 = arith.constant 5.000000e-02 : f32
    %227 = vector.broadcast %cst_60 : f32 to vector<4x8xf32>
    %228 = arith.mulf %227, %224 : vector<4x8xf32>
    %229 = arith.select %226, %224, %228 : vector<4x8xi1>, vector<4x8xf32>
    %230 = vector.shape_cast %229 : vector<4x8xf32> to vector<2x2x8xf32>
    %cst_61 = arith.constant dense<0.000000e+00> : vector<2x8xf32>
    %231 = vector.multi_reduction <add>, %230, %cst_61 [1] : vector<2x2x8xf32> to vector<2x8xf32>
    %cst_62 = arith.constant 2.000000e+00 : f32
    %232 = vector.broadcast %cst_62 : f32 to vector<2x8xf32>
    %233 = arith.divf %231, %232 : vector<2x8xf32>
    %c224 = arith.constant 224 : index
    %c0_63 = arith.constant 0 : index
    %234 = vector.load %arg2[%c224, %c0_63] : memref<240x64xbf16, #tpu.memory_space<vmem>>, vector<8x1xbf16>
    %235 = arith.truncf %233 : vector<2x8xf32> to vector<2x8xbf16>
    %cst_64 = arith.constant dense<0.000000e+00> : vector<2x1xf32>
    %236 = tpu.matmul %235, %234, %cst_64 {dimension_numbers = #tpu.dot_dimension_numbers<[1], [0], [0], [1], [0, 0, 1, 1], [], []>} : vector<2x8xbf16>, vector<8x1xbf16>, vector<2x1xf32> -> vector<2x1xf32>
    %237 = vector.broadcast %18 : vector<1x1xf32> to vector<2x1xf32>
    %238 = arith.addf %236, %237 : vector<2x1xf32>
    %239 = arith.negf %238 : vector<2x1xf32>
    %240 = math.exp %239 : vector<2x1xf32>
    %cst_65 = arith.constant 1.000000e+00 : f32
    %241 = vector.broadcast %cst_65 : f32 to vector<2x1xf32>
    %242 = arith.addf %241, %240 : vector<2x1xf32>
    %243 = arith.divf %241, %242 : vector<2x1xf32>
    %244 = vector.shape_cast %243 : vector<2x1xf32> to vector<2x1x1xf32>
    %c0_66 = arith.constant 0 : index
    %c0_67 = arith.constant 0 : index
    %c0_68 = arith.constant 0 : index
    %245 = vector.load %arg4[%c0_66, %c0_67, %c0_68] : memref<2x1x1xf32, #tpu.memory_space<vmem>>, vector<2x1x1xf32>
    tpu.vector_store %arg4[%c0_66, %c0_67, %c0_68], %244 {strides = array<i32>} : memref<2x1x1xf32, #tpu.memory_space<vmem>>, vector<2x1x1xf32>,
    return
  }
  func.func @transform_0(%arg0: i32) -> (i32, i32, i32) {
    %c0_i32 = arith.constant 0 : i32
    %c0_i32_0 = arith.constant 0 : i32
    %c0_i32_1 = arith.constant 0 : i32
    return %arg0, %c0_i32, %c0_i32_0 : i32, i32, i32
  }
  func.func @transform_1(%arg0: i32) -> (i32, i32) {
    %c0_i32 = arith.constant 0 : i32
    %c0_i32_0 = arith.constant 0 : i32
    %c0_i32_1 = arith.constant 0 : i32
    return %c0_i32, %c0_i32_0 : i32, i32
  }
  func.func @transform_2(%arg0: i32) -> (i32, i32) {
    %c0_i32 = arith.constant 0 : i32
    %c0_i32_0 = arith.constant 0 : i32
    %c0_i32_1 = arith.constant 0 : i32
    return %c0_i32, %c0_i32_0 : i32, i32
  }
  func.func @transform_3(%arg0: i32) -> (i32, i32, i32) {
    %c0_i32 = arith.constant 0 : i32
    %c0_i32_0 = arith.constant 0 : i32
    %c0_i32_1 = arith.constant 0 : i32
    return %arg0, %c0_i32, %c0_i32_0 : i32, i32, i32
  }
}

</mosaic_0001>

<llo_original>
// kernel: tpu_custom_call.1
$region0: #{tpu_custom_call.1}
  #allocation0 [shape = 'u32[]', space=smem, size = 0x4, offset = 0x4, fixed_abs, tag = 'smem constant byte address 0x4 - core index']
  #allocation1 [shape = 'u32[72,128]{1,0:T(1,128)}', space=vmem, size = 0x9000, scoped, tag = 'internal scratch']
  %s0 = inlined_call_operand.vmem [shape: bf16[2,64,16], index: 0, kind: input, shape index: {}]
  %s1 = inlined_call_operand.vmem [shape: bf16[240,64], index: 1, kind: input, shape index: {}]
  %s2 = inlined_call_operand.vmem [shape: f32[18,64], index: 2, kind: input, shape index: {}]
  %s3 = inlined_call_operand.vmem [shape: f32[2,1,1], index: 3, kind: output, shape index: {}]
  %s4 = sld [smem:[#allocation0]]
  $region22: #{tpu_custom_call.1} parent=0
    _
  %s6 = ssub.s32 1, %s4
  %s7 = scalar_select 0, %s6, %s4
  // Predicated region
  $region2: #{tpu_custom_call.1} parent=0 // pred_check
    _
  $region3: #{tpu_custom_call.1} parent=0 // pred_check_branch
    %9 = sbr.rel (0) target = $region5
  $region4: #{tpu_custom_call.1} parent=0 // pred_region
    _
  $region5: #{tpu_custom_call.1} parent=0 // pred_fallthru
    _
  // Predicated region
  $region6: #{tpu_custom_call.1} parent=0 // pred_check
    _
  $region7: #{tpu_custom_call.1} parent=0 // pred_check_branch
    %11 = sbr.rel (0) target = $region9
  $region8: #{tpu_custom_call.1} parent=0 // pred_region
    _
  $region9: #{tpu_custom_call.1} parent=0 // pred_fallthru
    _
  // Predicated region
  $region10: #{tpu_custom_call.1} parent=0 // pred_check
    _
  $region11: #{tpu_custom_call.1} parent=0 // pred_check_branch
    %13 = sbr.rel (0) target = $region13
  $region12: #{tpu_custom_call.1} parent=0 // pred_region
    _
  $region13: #{tpu_custom_call.1} parent=0 // pred_fallthru
    _
  %v15 = vld [vmem:[%s2] sm:$0xff]
  %v16 = vld [vmem:[%s2 + $0x8] sm:$0xff]
  %v17 = vld [vmem:[%s2 + $0x10] sm:$0x3]
  %v18 = vld [vmem:[%s0] sm:$0xf]
  %v19 = vld [vmem:[%s0 + $0x4] sm:$0xf]
  %v20 = vld [vmem:[%s0 + $0x8] sm:$0xf]
  %v21 = vld [vmem:[%s0 + $0xc] sm:$0xf]
  %v22 = vld [vmem:[%s0 + $0x10] sm:$0xf]
  %v23 = vld [vmem:[%s0 + $0x14] sm:$0xf]
  %v24 = vld [vmem:[%s0 + $0x18] sm:$0xf]
  %v25 = vld [vmem:[%s0 + $0x1c] sm:$0xf]
  %v26 = vld [vmem:[%s0 + $0x20] sm:$0xf]
  %v27 = vld [vmem:[%s0 + $0x24] sm:$0xf]
  %v28 = vld [vmem:[%s0 + $0x28] sm:$0xf]
  %v29 = vld [vmem:[%s0 + $0x2c] sm:$0xf]
  %v30 = vld [vmem:[%s0 + $0x30] sm:$0xf]
  %v31 = vld [vmem:[%s0 + $0x34] sm:$0xf]
  %v32 = vld [vmem:[%s0 + $0x38] sm:$0xf]
  %v33 = vld [vmem:[%s0 + $0x3c] sm:$0xf]
  %v34 = vld [vmem:[%s1] sm:$0xf]
  %v35 = vld [vmem:[%s1 + $0x4] sm:$0xf]
  %v36 = vperm.slane %v15, 0
  %v53 = vunpack.c.l.b16 %v18
  %v54 = vunpack.c.l.b16 %v19
  %v55 = vunpack.c.l.b16 %v20
  %v56 = vunpack.c.l.b16 %v21
  %v57 = vunpack.c.l.b16 %v22
  %v58 = vunpack.c.l.b16 %v23
  %v59 = vunpack.c.l.b16 %v24
  %v60 = vunpack.c.l.b16 %v25
  %v61 = vunpack.c.l.b16 %v26
  %v62 = vunpack.c.l.b16 %v27
  %v63 = vunpack.c.l.b16 %v28
  %v64 = vunpack.c.l.b16 %v29
  %v65 = vunpack.c.l.b16 %v30
  %v66 = vunpack.c.l.b16 %v31
  %v67 = vunpack.c.l.b16 %v32
  %v68 = vunpack.c.l.b16 %v33
  %v69 = vpack.c.b16 %v54, %v53
  %v70 = vpack.c.b16 %v56, %v55
  %v71 = vpack.c.b16 %v58, %v57
  %v72 = vpack.c.b16 %v60, %v59
  %v73 = vpack.c.b16 %v62, %v61
  %v74 = vpack.c.b16 %v64, %v63
  %v75 = vpack.c.b16 %v66, %v65
  %v76 = vpack.c.b16 %v68, %v67
  %v79 = vunpack.c.l.b16 %v34
  %v80 = vunpack.c.l.b16 %v35
  %v81 = vpack.c.b16 %v80, %v79
  %vm83 = vcmask 130048
  %v85 = vsel %vm83, %v69, 0
  %v88 = vsel %vm83, %v70, 0
  %v91 = vsel %vm83, %v71, 0
  %v94 = vsel %vm83, %v72, 0
  %v97 = vsel %vm83, %v73, 0
  %v100 = vsel %vm83, %v74, 0
  %v103 = vsel %vm83, %v75, 0
  %v106 = vsel %vm83, %v76, 0
  %108 = vmatpush.bf16.msra.mxu0 0
  %109 = vmatpush.bf16.msra.mxu0 0
  %110 = vmatpush.bf16.msra.mxu0 0
  %111 = vmatpush.bf16.msra.mxu0 0
  %112 = vmatpush.bf16.msra.mxu0 0
  %113 = vmatpush.bf16.msra.mxu0 0
  %114 = vmatpush.bf16.msra.mxu0 0
  %115 = vmatpush.bf16.msra.mxu0 %v81
  %116 = vmatmul.bf16.gmra.mxu0 %v85
  %v117 = vpop.f32.mrf.mxu0
  %v118 = vadd.f32 %v36, %v117
  %v119 = vpop.f32.mrf.mxu0
  %v120 = vadd.f32 %v36, %v119
  %121 = vmatmul.bf16.gmra.mxu0 %v88
  %v122 = vpop.f32.mrf.mxu0
  %v123 = vadd.f32 %v36, %v122
  %v124 = vpop.f32.mrf.mxu0
  %v125 = vadd.f32 %v36, %v124
  %126 = vmatmul.bf16.gmra.mxu0 %v91
  %v127 = vpop.f32.mrf.mxu0
  %v128 = vadd.f32 %v36, %v127
  %v129 = vpop.f32.mrf.mxu0
  %v130 = vadd.f32 %v36, %v129
  %131 = vmatmul.bf16.gmra.mxu0 %v94
  %v132 = vpop.f32.mrf.mxu0
  %v133 = vadd.f32 %v36, %v132
  %v134 = vpop.f32.mrf.mxu0
  %v135 = vadd.f32 %v36, %v134
  %136 = vmatmul.bf16.gmra.mxu0 %v97
  %v137 = vpop.f32.mrf.mxu0
  %v138 = vadd.f32 %v36, %v137
  %v139 = vpop.f32.mrf.mxu0
  %v140 = vadd.f32 %v36, %v139
  %141 = vmatmul.bf16.gmra.mxu0 %v100
  %v142 = vpop.f32.mrf.mxu0
  %v143 = vadd.f32 %v36, %v142
  %v144 = vpop.f32.mrf.mxu0
  %v145 = vadd.f32 %v36, %v144
  %146 = vmatmul.bf16.gmra.mxu0 %v103
  %v147 = vpop.f32.mrf.mxu0
  %v148 = vadd.f32 %v36, %v147
  %v149 = vpop.f32.mrf.mxu0
  %v150 = vadd.f32 %v36, %v149
  %151 = vmatmul.bf16.gmra.mxu0 %v106
  %v152 = vpop.f32.mrf.mxu0
  %v153 = vadd.f32 %v36, %v152
  %v154 = vpop.f32.mrf.mxu0
  %v155 = vadd.f32 %v36, %v154
  %156 = vdwg.mxu0
  %vm157 = vcmask 261120
  %v158 = vsel %vm157, %v118, 0.0
  %159 = vadd.xlane.f32.xlu0 %v158
  %v160 = vpop.xlane.xlu0 %159
  %v161 = vsel %vm157, %v120, 0.0
  %162 = vadd.xlane.f32.xlu0 %v161
  %v163 = vpop.xlane.xlu0 %162
  %v164 = vsel %vm157, %v123, 0.0
  %165 = vadd.xlane.f32.xlu0 %v164
  %v166 = vpop.xlane.xlu0 %165
  %v167 = vsel %vm157, %v125, 0.0
  %168 = vadd.xlane.f32.xlu0 %v167
  %v169 = vpop.xlane.xlu0 %168
  %v170 = vsel %vm157, %v128, 0.0
  %171 = vadd.xlane.f32.xlu0 %v170
  %v172 = vpop.xlane.xlu0 %171
  %v173 = vsel %vm157, %v130, 0.0
  %174 = vadd.xlane.f32.xlu0 %v173
  %v175 = vpop.xlane.xlu0 %174
  %v176 = vsel %vm157, %v133, 0.0
  %177 = vadd.xlane.f32.xlu0 %v176
  %v178 = vpop.xlane.xlu0 %177
  %v179 = vsel %vm157, %v135, 0.0
  %180 = vadd.xlane.f32.xlu0 %v179
  %v181 = vpop.xlane.xlu0 %180
  %v182 = vsel %vm157, %v138, 0.0
  %183 = vadd.xlane.f32.xlu0 %v182
  %v184 = vpop.xlane.xlu0 %183
  %v185 = vsel %vm157, %v140, 0.0
  %186 = vadd.xlane.f32.xlu0 %v185
  %v187 = vpop.xlane.xlu0 %186
  %v188 = vsel %vm157, %v143, 0.0
  %189 = vadd.xlane.f32.xlu0 %v188
  %v190 = vpop.xlane.xlu0 %189
  %v191 = vsel %vm157, %v145, 0.0
  %192 = vadd.xlane.f32.xlu0 %v191
  %v193 = vpop.xlane.xlu0 %192
  %v194 = vsel %vm157, %v148, 0.0
  %195 = vadd.xlane.f32.xlu0 %v194
  %v196 = vpop.xlane.xlu0 %195
  %v197 = vsel %vm157, %v150, 0.0
  %198 = vadd.xlane.f32.xlu0 %v197
  %v199 = vpop.xlane.xlu0 %198
  %v200 = vsel %vm157, %v153, 0.0
  %201 = vadd.xlane.f32.xlu0 %v200
  %v202 = vpop.xlane.xlu0 %201
  %v203 = vsel %vm157, %v155, 0.0
  %204 = vadd.xlane.f32.xlu0 %v203
  %v205 = vpop.xlane.xlu0 %204
  %v206 = vrcp.pop 32.0
  %v207 = vmul.f32 32.0, %v206
  %v208 = vsub.f32 1.0, %v207
  %v209 = vmul.f32 %v206, %v208
  %v210 = vadd.f32 %v206, %v209
  %vm211 = vweird.f32 %v206
  %v212 = vsel %vm211, %v206, %v210
  %v213 = vmul.f32 %v160, %v212
  %v214 = vmul.f32 %v163, %v212
  %v215 = vmul.f32 %v166, %v212
  %v216 = vmul.f32 %v169, %v212
  %v217 = vmul.f32 %v172, %v212
  %v218 = vmul.f32 %v175, %v212
  %v219 = vmul.f32 %v178, %v212
  %v220 = vmul.f32 %v181, %v212
  %v221 = vmul.f32 %v184, %v212
  %v222 = vmul.f32 %v187, %v212
  %v223 = vmul.f32 %v190, %v212
  %v224 = vmul.f32 %v193, %v212
  %v225 = vmul.f32 %v196, %v212
  %v226 = vmul.f32 %v199, %v212
  %v227 = vmul.f32 %v202, %v212
  %v228 = vmul.f32 %v205, %v212
  %v229 = vsub.f32 %v118, %v213
  %v230 = vsub.f32 %v120, %v214
  %v231 = vsub.f32 %v123, %v215
  %v232 = vsub.f32 %v125, %v216
  %v233 = vsub.f32 %v128, %v217
  %v234 = vsub.f32 %v130, %v218
  %v235 = vsub.f32 %v133, %v219
  %v236 = vsub.f32 %v135, %v220
  %v237 = vsub.f32 %v138, %v221
  %v238 = vsub.f32 %v140, %v222
  %v239 = vsub.f32 %v143, %v223
  %v240 = vsub.f32 %v145, %v224
  %v241 = vsub.f32 %v148, %v225
  %v242 = vsub.f32 %v150, %v226
  %v243 = vsub.f32 %v153, %v227
  %v244 = vsub.f32 %v155, %v228
  %v245 = vmul.f32 %v229, %v229
  %v246 = vmul.f32 %v230, %v230
  %v247 = vmul.f32 %v231, %v231
  %v248 = vmul.f32 %v232, %v232
  %v249 = vmul.f32 %v233, %v233
  %v250 = vmul.f32 %v234, %v234
  %v251 = vmul.f32 %v235, %v235
  %v252 = vmul.f32 %v236, %v236
  %v253 = vmul.f32 %v237, %v237
  %v254 = vmul.f32 %v238, %v238
  %v255 = vmul.f32 %v239, %v239
  %v256 = vmul.f32 %v240, %v240
  %v257 = vmul.f32 %v241, %v241
  %v258 = vmul.f32 %v242, %v242
  %v259 = vmul.f32 %v243, %v243
  %v260 = vmul.f32 %v244, %v244
  %v261 = vsel %vm157, %v245, 0.0
  %262 = vadd.xlane.f32.xlu0 %v261
  %v263 = vpop.xlane.xlu0 %262
  %v264 = vsel %vm157, %v246, 0.0
  %265 = vadd.xlane.f32.xlu0 %v264
  %v266 = vpop.xlane.xlu0 %265
  %v267 = vsel %vm157, %v247, 0.0
  %268 = vadd.xlane.f32.xlu0 %v267
  %v269 = vpop.xlane.xlu0 %268
  %v270 = vsel %vm157, %v248, 0.0
  %271 = vadd.xlane.f32.xlu0 %v270
  %v272 = vpop.xlane.xlu0 %271
  %v273 = vsel %vm157, %v249, 0.0
  %274 = vadd.xlane.f32.xlu0 %v273
  %v275 = vpop.xlane.xlu0 %274
  %v276 = vsel %vm157, %v250, 0.0
  %277 = vadd.xlane.f32.xlu0 %v276
  %v278 = vpop.xlane.xlu0 %277
  %v279 = vsel %vm157, %v251, 0.0
  %280 = vadd.xlane.f32.xlu0 %v279
  %v281 = vpop.xlane.xlu0 %280
  %v282 = vsel %vm157, %v252, 0.0
  %283 = vadd.xlane.f32.xlu0 %v282
  %v284 = vpop.xlane.xlu0 %283
  %v285 = vsel %vm157, %v253, 0.0
  %286 = vadd.xlane.f32.xlu0 %v285
  %v287 = vpop.xlane.xlu0 %286
  %v288 = vsel %vm157, %v254, 0.0
  %289 = vadd.xlane.f32.xlu0 %v288
  %v290 = vpop.xlane.xlu0 %289
  %v291 = vsel %vm157, %v255, 0.0
  %292 = vadd.xlane.f32.xlu0 %v291
  %v293 = vpop.xlane.xlu0 %292
  %v294 = vsel %vm157, %v256, 0.0
  %295 = vadd.xlane.f32.xlu0 %v294
  %v296 = vpop.xlane.xlu0 %295
  %v297 = vsel %vm157, %v257, 0.0
  %298 = vadd.xlane.f32.xlu0 %v297
  %v299 = vpop.xlane.xlu0 %298
  %v300 = vsel %vm157, %v258, 0.0
  %301 = vadd.xlane.f32.xlu0 %v300
  %v302 = vpop.xlane.xlu0 %301
  %v303 = vsel %vm157, %v259, 0.0
  %304 = vadd.xlane.f32.xlu0 %v303
  %v305 = vpop.xlane.xlu0 %304
  %v306 = vsel %vm157, %v260, 0.0
  %307 = vadd.xlane.f32.xlu0 %v306
  %v308 = vpop.xlane.xlu0 %307
  %v309 = vmul.f32 %v263, %v212
  %v310 = vmul.f32 %v266, %v212
  %v311 = vmul.f32 %v269, %v212
  %v312 = vmul.f32 %v272, %v212
  %v313 = vmul.f32 %v275, %v212
  %v314 = vmul.f32 %v278, %v212
  %v315 = vmul.f32 %v281, %v212
  %v316 = vmul.f32 %v284, %v212
  %v317 = vmul.f32 %v287, %v212
  %v318 = vmul.f32 %v290, %v212
  %v319 = vmul.f32 %v293, %v212
  %v320 = vmul.f32 %v296, %v212
  %v321 = vmul.f32 %v299, %v212
  %v322 = vmul.f32 %v302, %v212
  %v323 = vmul.f32 %v305, %v212
  %v324 = vmul.f32 %v308, %v212
  %v325 = vadd.f32 %v309, 1e-05
  %v326 = vadd.f32 %v310, 1e-05
  %v327 = vadd.f32 %v311, 1e-05
  %v328 = vadd.f32 %v312, 1e-05
  %v329 = vadd.f32 %v313, 1e-05
  %v330 = vadd.f32 %v314, 1e-05
  %v331 = vadd.f32 %v315, 1e-05
  %v332 = vadd.f32 %v316, 1e-05
  %v333 = vadd.f32 %v317, 1e-05
  %v334 = vadd.f32 %v318, 1e-05
  %v335 = vadd.f32 %v319, 1e-05
  %v336 = vadd.f32 %v320, 1e-05
  %v337 = vadd.f32 %v321, 1e-05
  %v338 = vadd.f32 %v322, 1e-05
  %v339 = vadd.f32 %v323, 1e-05
  %v340 = vadd.f32 %v324, 1e-05
  %v341 = vrsqrt.pop %v325
  %v342 = vmul.f32 %v341, %v325
  %v343 = vmul.f32 %v342, %v341
  %v344 = vmul.f32 0.5, %v343
  %v345 = vsub.f32 1.5, %v344
  %v346 = vmul.f32 %v341, %v345
  %vm347 = vweird.f32 %v325
  %vm348 = vweird.f32 %v341
  %vm349 = vmor %vm347, %vm348
  %v350 = vsel %vm349, %v341, %v346
  %v351 = vrsqrt.pop %v326
  %v352 = vmul.f32 %v351, %v326
  %v353 = vmul.f32 %v352, %v351
  %v354 = vmul.f32 0.5, %v353
  %v355 = vsub.f32 1.5, %v354
  %v356 = vmul.f32 %v351, %v355
  %vm357 = vweird.f32 %v326
  %vm358 = vweird.f32 %v351
  %vm359 = vmor %vm357, %vm358
  %v360 = vsel %vm359, %v351, %v356
  %v361 = vrsqrt.pop %v327
  %v362 = vmul.f32 %v361, %v327
  %v363 = vmul.f32 %v362, %v361
  %v364 = vmul.f32 0.5, %v363
  %v365 = vsub.f32 1.5, %v364
  %v366 = vmul.f32 %v361, %v365
  %vm367 = vweird.f32 %v327
  %vm368 = vweird.f32 %v361
  %vm369 = vmor %vm367, %vm368
  %v370 = vsel %vm369, %v361, %v366
  %v371 = vrsqrt.pop %v328
  %v372 = vmul.f32 %v371, %v328
  %v373 = vmul.f32 %v372, %v371
  %v374 = vmul.f32 0.5, %v373
  %v375 = vsub.f32 1.5, %v374
  %v376 = vmul.f32 %v371, %v375
  %vm377 = vweird.f32 %v328
  %vm378 = vweird.f32 %v371
  %vm379 = vmor %vm377, %vm378
  %v380 = vsel %vm379, %v371, %v376
  %v381 = vrsqrt.pop %v329
  %v382 = vmul.f32 %v381, %v329
  %v383 = vmul.f32 %v382, %v381
  %v384 = vmul.f32 0.5, %v383
  %v385 = vsub.f32 1.5, %v384
  %v386 = vmul.f32 %v381, %v385
  %vm387 = vweird.f32 %v329
  %vm388 = vweird.f32 %v381
  %vm389 = vmor %vm387, %vm388
  %v390 = vsel %vm389, %v381, %v386
  %v391 = vrsqrt.pop %v330
  %v392 = vmul.f32 %v391, %v330
  %v393 = vmul.f32 %v392, %v391
  %v394 = vmul.f32 0.5, %v393
  %v395 = vsub.f32 1.5, %v394
  %v396 = vmul.f32 %v391, %v395
  %vm397 = vweird.f32 %v330
  %vm398 = vweird.f32 %v391
  %vm399 = vmor %vm397, %vm398
  %v400 = vsel %vm399, %v391, %v396
  %v401 = vrsqrt.pop %v331
  %v402 = vmul.f32 %v401, %v331
  %v403 = vmul.f32 %v402, %v401
  %v404 = vmul.f32 0.5, %v403
  %v405 = vsub.f32 1.5, %v404
  %v406 = vmul.f32 %v401, %v405
  %vm407 = vweird.f32 %v331
  %vm408 = vweird.f32 %v401
  %vm409 = vmor %vm407, %vm408
  %v410 = vsel %vm409, %v401, %v406
  %v411 = vrsqrt.pop %v332
  %v412 = vmul.f32 %v411, %v332
  %v413 = vmul.f32 %v412, %v411
  %v414 = vmul.f32 0.5, %v413
  %v415 = vsub.f32 1.5, %v414
  %v416 = vmul.f32 %v411, %v415
  %vm417 = vweird.f32 %v332
  %vm418 = vweird.f32 %v411
  %vm419 = vmor %vm417, %vm418
  %v420 = vsel %vm419, %v411, %v416
  %v421 = vrsqrt.pop %v333
  %v422 = vmul.f32 %v421, %v333
  %v423 = vmul.f32 %v422, %v421
  %v424 = vmul.f32 0.5, %v423
  %v425 = vsub.f32 1.5, %v424
  %v426 = vmul.f32 %v421, %v425
  %vm427 = vweird.f32 %v333
  %vm428 = vweird.f32 %v421
  %vm429 = vmor %vm427, %vm428
  %v430 = vsel %vm429, %v421, %v426
  %v431 = vrsqrt.pop %v334
  %v432 = vmul.f32 %v431, %v334
  %v433 = vmul.f32 %v432, %v431
  %v434 = vmul.f32 0.5, %v433
  %v435 = vsub.f32 1.5, %v434
  %v436 = vmul.f32 %v431, %v435
  %vm437 = vweird.f32 %v334
  %vm438 = vweird.f32 %v431
  %vm439 = vmor %vm437, %vm438
  %v440 = vsel %vm439, %v431, %v436
  %v441 = vrsqrt.pop %v335
  %v442 = vmul.f32 %v441, %v335
  %v443 = vmul.f32 %v442, %v441
  %v444 = vmul.f32 0.5, %v443
  %v445 = vsub.f32 1.5, %v444
  %v446 = vmul.f32 %v441, %v445
  %vm447 = vweird.f32 %v335
  %vm448 = vweird.f32 %v441
  %vm449 = vmor %vm447, %vm448
  %v450 = vsel %vm449, %v441, %v446
  %v451 = vrsqrt.pop %v336
  %v452 = vmul.f32 %v451, %v336
  %v453 = vmul.f32 %v452, %v451
  %v454 = vmul.f32 0.5, %v453
  %v455 = vsub.f32 1.5, %v454
  %v456 = vmul.f32 %v451, %v455
  %vm457 = vweird.f32 %v336
  %vm458 = vweird.f32 %v451
  %vm459 = vmor %vm457, %vm458
  %v460 = vsel %vm459, %v451, %v456
  %v461 = vrsqrt.pop %v337
  %v462 = vmul.f32 %v461, %v337
  %v463 = vmul.f32 %v462, %v461
  %v464 = vmul.f32 0.5, %v463
  %v465 = vsub.f32 1.5, %v464
  %v466 = vmul.f32 %v461, %v465
  %vm467 = vweird.f32 %v337
  %vm468 = vweird.f32 %v461
  %vm469 = vmor %vm467, %vm468
  %v470 = vsel %vm469, %v461, %v466
  %v471 = vrsqrt.pop %v338
  %v472 = vmul.f32 %v471, %v338
  %v473 = vmul.f32 %v472, %v471
  %v474 = vmul.f32 0.5, %v473
  %v475 = vsub.f32 1.5, %v474
  %v476 = vmul.f32 %v471, %v475
  %vm477 = vweird.f32 %v338
  %vm478 = vweird.f32 %v471
  %vm479 = vmor %vm477, %vm478
  %v480 = vsel %vm479, %v471, %v476
  %v481 = vrsqrt.pop %v339
  %v482 = vmul.f32 %v481, %v339
  %v483 = vmul.f32 %v482, %v481
  %v484 = vmul.f32 0.5, %v483
  %v485 = vsub.f32 1.5, %v484
  %v486 = vmul.f32 %v481, %v485
  %vm487 = vweird.f32 %v339
  %vm488 = vweird.f32 %v481
  %vm489 = vmor %vm487, %vm488
  %v490 = vsel %vm489, %v481, %v486
  %v491 = vrsqrt.pop %v340
  %v492 = vmul.f32 %v491, %v340
  %v493 = vmul.f32 %v492, %v491
  %v494 = vmul.f32 0.5, %v493
  %v495 = vsub.f32 1.5, %v494
  %v496 = vmul.f32 %v491, %v495
  %vm497 = vweird.f32 %v340
  %vm498 = vweird.f32 %v491
  %vm499 = vmor %vm497, %vm498
  %v500 = vsel %vm499, %v491, %v496
  %v501 = vmul.f32 %v229, %v350
  %v502 = vmul.f32 %v230, %v360
  %v503 = vmul.f32 %v231, %v370
  %v504 = vmul.f32 %v232, %v380
  %v505 = vmul.f32 %v233, %v390
  %v506 = vmul.f32 %v234, %v400
  %v507 = vmul.f32 %v235, %v410
  %v508 = vmul.f32 %v236, %v420
  %v509 = vmul.f32 %v237, %v430
  %v510 = vmul.f32 %v238, %v440
  %v511 = vmul.f32 %v239, %v450
  %v512 = vmul.f32 %v240, %v460
  %v513 = vmul.f32 %v241, %v470
  %v514 = vmul.f32 %v242, %v480
  %v515 = vmul.f32 %v243, %v490
  %v516 = vmul.f32 %v244, %v500
  %v517 = vperm.slane %v15, 1
  %v518 = vmul.f32 %v501, %v517
  %v519 = vmul.f32 %v502, %v517
  %v520 = vmul.f32 %v503, %v517
  %v521 = vmul.f32 %v504, %v517
  %v522 = vmul.f32 %v505, %v517
  %v523 = vmul.f32 %v506, %v517
  %v524 = vmul.f32 %v507, %v517
  %v525 = vmul.f32 %v508, %v517
  %v526 = vmul.f32 %v509, %v517
  %v527 = vmul.f32 %v510, %v517
  %v528 = vmul.f32 %v511, %v517
  %v529 = vmul.f32 %v512, %v517
  %v530 = vmul.f32 %v513, %v517
  %v531 = vmul.f32 %v514, %v517
  %v532 = vmul.f32 %v515, %v517
  %v533 = vmul.f32 %v516, %v517
  %v534 = vperm.slane %v15, 2
  %v535 = vadd.f32 %v518, %v534
  %v536 = vadd.f32 %v519, %v534
  %v537 = vadd.f32 %v520, %v534
  %v538 = vadd.f32 %v521, %v534
  %v539 = vadd.f32 %v522, %v534
  %v540 = vadd.f32 %v523, %v534
  %v541 = vadd.f32 %v524, %v534
  %v542 = vadd.f32 %v525, %v534
  %v543 = vadd.f32 %v526, %v534
  %v544 = vadd.f32 %v527, %v534
  %v545 = vadd.f32 %v528, %v534
  %v546 = vadd.f32 %v529, %v534
  %v547 = vadd.f32 %v530, %v534
  %v548 = vadd.f32 %v531, %v534
  %v549 = vadd.f32 %v532, %v534
  %v550 = vadd.f32 %v533, %v534
  %v551 = vlaneseq
  %v552 = vshrl.u32 %v551, 7
  %v553 = vadd.s32 %v552, 8
  %v554 = vadd.s32 %v552, 16
  %v555 = vadd.s32 %v552, 24
  %v556 = vadd.s32 %v552, 32
  %v557 = vadd.s32 %v552, 40
  %v558 = vadd.s32 %v552, 48
  %v559 = vadd.s32 %v552, 56
  %vm560 = vcmp.eq.s32.totalorder %v552, 0
  %vm561 = vcmp.eq.s32.totalorder %v553, 0
  %vm562 = vcmp.eq.s32.totalorder %v554, 0
  %vm563 = vcmp.eq.s32.totalorder %v555, 0
  %vm564 = vcmp.eq.s32.totalorder %v556, 0
  %vm565 = vcmp.eq.s32.totalorder %v557, 0
  %vm566 = vcmp.eq.s32.totalorder %v558, 0
  %vm567 = vcmp.eq.s32.totalorder %v559, 0
  %v568 = vrot.slane %v535, 7
  %v569 = vrot.slane %v536, 7
  %v570 = vrot.slane %v537, 7
  %v571 = vrot.slane %v538, 7
  %v572 = vrot.slane %v539, 7
  %v573 = vrot.slane %v540, 7
  %v574 = vrot.slane %v541, 7
  %v575 = vrot.slane %v542, 7
  %v576 = vrot.slane %v543, 7
  %v577 = vrot.slane %v544, 7
  %v578 = vrot.slane %v545, 7
  %v579 = vrot.slane %v546, 7
  %v580 = vrot.slane %v547, 7
  %v581 = vrot.slane %v548, 7
  %v582 = vrot.slane %v549, 7
  %v583 = vrot.slane %v550, 7
  %vm584 = vcmp.lt.s32.totalorder %v552, 1
  %v585 = vsel %vm584, %v582, %v583
  %v586 = vsel %vm584, %v581, %v582
  %v587 = vsel %vm584, %v580, %v581
  %v588 = vsel %vm584, %v579, %v580
  %v589 = vsel %vm584, %v578, %v579
  %v590 = vsel %vm584, %v577, %v578
  %v591 = vsel %vm584, %v576, %v577
  %v592 = vsel %vm584, %v575, %v576
  %v593 = vsel %vm584, %v574, %v575
  %v594 = vsel %vm584, %v573, %v574
  %v595 = vsel %vm584, %v572, %v573
  %v596 = vsel %vm584, %v571, %v572
  %v597 = vsel %vm584, %v570, %v571
  %v598 = vsel %vm584, %v569, %v570
  %v599 = vsel %vm584, %v568, %v569
  %v600 = vsel %vm584, %v583, %v568
  %v601 = vsel %vm560, 0.0, %v600
  %v602 = vsel %vm561, 0.0, %v599
  %v603 = vsel %vm562, 0.0, %v598
  %v604 = vsel %vm563, 0.0, %v597
  %v605 = vsel %vm564, 0.0, %v596
  %v606 = vsel %vm565, 0.0, %v595
  %v607 = vsel %vm566, 0.0, %v594
  %v608 = vsel %vm567, 0.0, %v593
  %v609 = vsel %vm560, 0.0, %v592
  %v610 = vsel %vm561, 0.0, %v591
  %v611 = vsel %vm562, 0.0, %v590
  %v612 = vsel %vm563, 0.0, %v589
  %v613 = vsel %vm564, 0.0, %v588
  %v614 = vsel %vm565, 0.0, %v587
  %v615 = vsel %vm566, 0.0, %v586
  %v616 = vsel %vm567, 0.0, %v585
  %vm617 = vcmp.eq.s32.totalorder %v552, 63
  %vm618 = vcmp.eq.s32.totalorder %v553, 63
  %vm619 = vcmp.eq.s32.totalorder %v554, 63
  %vm620 = vcmp.eq.s32.totalorder %v555, 63
  %vm621 = vcmp.eq.s32.totalorder %v556, 63
  %vm622 = vcmp.eq.s32.totalorder %v557, 63
  %vm623 = vcmp.eq.s32.totalorder %v558, 63
  %vm624 = vcmp.eq.s32.totalorder %v559, 63
  %v625 = vrot.slane %v535, 1
  %v626 = vrot.slane %v536, 1
  %v627 = vrot.slane %v537, 1
  %v628 = vrot.slane %v538, 1
  %v629 = vrot.slane %v539, 1
  %v630 = vrot.slane %v540, 1
  %v631 = vrot.slane %v541, 1
  %v632 = vrot.slane %v542, 1
  %v633 = vrot.slane %v543, 1
  %v634 = vrot.slane %v544, 1
  %v635 = vrot.slane %v545, 1
  %v636 = vrot.slane %v546, 1
  %v637 = vrot.slane %v547, 1
  %v638 = vrot.slane %v548, 1
  %v639 = vrot.slane %v549, 1
  %v640 = vrot.slane %v550, 1
  %vm641 = vcmp.lt.s32.totalorder %v552, 7
  %v642 = vsel %vm641, %v639, %v640
  %v643 = vsel %vm641, %v638, %v639
  %v644 = vsel %vm641, %v637, %v638
  %v645 = vsel %vm641, %v636, %v637
  %v646 = vsel %vm641, %v635, %v636
  %v647 = vsel %vm641, %v634, %v635
  %v648 = vsel %vm641, %v633, %v634
  %v649 = vsel %vm641, %v632, %v633
  %v650 = vsel %vm641, %v631, %v632
  %v651 = vsel %vm641, %v630, %v631
  %v652 = vsel %vm641, %v629, %v630
  %v653 = vsel %vm641, %v628, %v629
  %v654 = vsel %vm641, %v627, %v628
  %v655 = vsel %vm641, %v626, %v627
  %v656 = vsel %vm641, %v625, %v626
  %v657 = vsel %vm641, %v640, %v625
  %v658 = vsel %vm617, 0.0, %v656
  %v659 = vsel %vm618, 0.0, %v655
  %v660 = vsel %vm619, 0.0, %v654
  %v661 = vsel %vm620, 0.0, %v653
  %v662 = vsel %vm621, 0.0, %v652
  %v663 = vsel %vm622, 0.0, %v651
  %v664 = vsel %vm623, 0.0, %v650
  %v665 = vsel %vm624, 0.0, %v649
  %v666 = vsel %vm617, 0.0, %v648
  %v667 = vsel %vm618, 0.0, %v647
  %v668 = vsel %vm619, 0.0, %v646
  %v669 = vsel %vm620, 0.0, %v645
  %v670 = vsel %vm621, 0.0, %v644
  %v671 = vsel %vm622, 0.0, %v643
  %v672 = vsel %vm623, 0.0, %v642
  %v673 = vsel %vm624, 0.0, %v657
  %v674 = vld [vmem:[%s1 + $0x8] sm:$0xf]
  %v675 = vld [vmem:[%s1 + $0xc] sm:$0xf]
  %v676 = vld [vmem:[%s1 + $0x10] sm:$0xf]
  %v677 = vld [vmem:[%s1 + $0x14] sm:$0xf]
  %v678 = vpack.c.bf16 %v602, %v601
  %v679 = vpack.c.bf16 %v604, %v603
  %v680 = vpack.c.bf16 %v606, %v605
  %v681 = vpack.c.bf16 %v608, %v607
  %v682 = vpack.c.bf16 %v610, %v609
  %v683 = vpack.c.bf16 %v612, %v611
  %v684 = vpack.c.bf16 %v614, %v613
  %v685 = vpack.c.bf16 %v616, %v615
  %v686 = vld [vmem:[%s1 + $0x18] sm:$0xf]
  %v687 = vld [vmem:[%s1 + $0x1c] sm:$0xf]
  %v688 = vld [vmem:[%s1 + $0x20] sm:$0xf]
  %v689 = vld [vmem:[%s1 + $0x24] sm:$0xf]
  %v690 = vpack.c.bf16 %v536, %v535
  %v691 = vpack.c.bf16 %v538, %v537
  %v692 = vpack.c.bf16 %v540, %v539
  %v693 = vpack.c.bf16 %v542, %v541
  %v694 = vpack.c.bf16 %v544, %v543
  %v695 = vpack.c.bf16 %v546, %v545
  %v696 = vpack.c.bf16 %v548, %v547
  %v697 = vpack.c.bf16 %v550, %v549
  %v702 = vunpack.c.l.b16 %v686
  %v703 = vunpack.c.l.b16 %v687
  %v704 = vunpack.c.l.b16 %v688
  %v705 = vunpack.c.l.b16 %v689
  %v706 = vpack.c.b16 %v703, %v702
  %v707 = vpack.c.b16 %v705, %v704
  %v711 = vsel %vm157, %v690, 0
  %v714 = vsel %vm157, %v691, 0
  %v717 = vsel %vm157, %v692, 0
  %v720 = vsel %vm157, %v693, 0
  %v723 = vsel %vm157, %v694, 0
  %v726 = vsel %vm157, %v695, 0
  %v729 = vsel %vm157, %v696, 0
  %v732 = vsel %vm157, %v697, 0
  %734 = vmatpush.bf16.msra.mxu0 0
  %735 = vmatpush.bf16.msra.mxu0 0
  %736 = vmatpush.bf16.msra.mxu0 0
  %737 = vmatpush.bf16.msra.mxu0 0
  %738 = vmatpush.bf16.msra.mxu0 0
  %739 = vmatpush.bf16.msra.mxu0 0
  %740 = vmatpush.bf16.msra.mxu0 %v707
  %741 = vmatpush.bf16.msra.mxu0 %v706
  %742 = vmatmul.bf16.gmra.mxu0 %v711
  %v743 = vpop.f32.mrf.mxu0
  %v744 = vadd.f32 0.0, %v743
  %v745 = vpop.f32.mrf.mxu0
  %v746 = vadd.f32 0.0, %v745
  %747 = vmatmul.bf16.gmra.mxu0 %v714
  %v748 = vpop.f32.mrf.mxu0
  %v749 = vadd.f32 0.0, %v748
  %v750 = vpop.f32.mrf.mxu0
  %v751 = vadd.f32 0.0, %v750
  %752 = vmatmul.bf16.gmra.mxu0 %v717
  %v753 = vpop.f32.mrf.mxu0
  %v754 = vadd.f32 0.0, %v753
  %v755 = vpop.f32.mrf.mxu0
  %v756 = vadd.f32 0.0, %v755
  %757 = vmatmul.bf16.gmra.mxu0 %v720
  %v758 = vpop.f32.mrf.mxu0
  %v759 = vadd.f32 0.0, %v758
  %v760 = vpop.f32.mrf.mxu0
  %v761 = vadd.f32 0.0, %v760
  %762 = vmatmul.bf16.gmra.mxu0 %v723
  %v763 = vpop.f32.mrf.mxu0
  %v764 = vadd.f32 0.0, %v763
  %v765 = vpop.f32.mrf.mxu0
  %v766 = vadd.f32 0.0, %v765
  %767 = vmatmul.bf16.gmra.mxu0 %v726
  %v768 = vpop.f32.mrf.mxu0
  %v769 = vadd.f32 0.0, %v768
  %v770 = vpop.f32.mrf.mxu0
  %v771 = vadd.f32 0.0, %v770
  %772 = vmatmul.bf16.gmra.mxu0 %v729
  %v773 = vpop.f32.mrf.mxu0
  %v774 = vadd.f32 0.0, %v773
  %v775 = vpop.f32.mrf.mxu0
  %v776 = vadd.f32 0.0, %v775
  %777 = vmatmul.bf16.gmra.mxu0 %v732
  %v778 = vpop.f32.mrf.mxu0
  %v779 = vadd.f32 0.0, %v778
  %v780 = vpop.f32.mrf.mxu0
  %v781 = vadd.f32 0.0, %v780
  %782 = vdwg.mxu0
  %v787 = vunpack.c.l.b16 %v674
  %v788 = vunpack.c.l.b16 %v675
  %v789 = vunpack.c.l.b16 %v676
  %v790 = vunpack.c.l.b16 %v677
  %v791 = vpack.c.b16 %v788, %v787
  %v792 = vpack.c.b16 %v790, %v789
  %v796 = vsel %vm157, %v678, 0
  %v799 = vsel %vm157, %v679, 0
  %v802 = vsel %vm157, %v680, 0
  %v805 = vsel %vm157, %v681, 0
  %v808 = vsel %vm157, %v682, 0
  %v811 = vsel %vm157, %v683, 0
  %v814 = vsel %vm157, %v684, 0
  %v817 = vsel %vm157, %v685, 0
  %819 = vmatpush.bf16.msra.mxu0 0
  %820 = vmatpush.bf16.msra.mxu0 0
  %821 = vmatpush.bf16.msra.mxu0 0
  %822 = vmatpush.bf16.msra.mxu0 0
  %823 = vmatpush.bf16.msra.mxu0 0
  %824 = vmatpush.bf16.msra.mxu0 0
  %825 = vmatpush.bf16.msra.mxu0 %v792
  %826 = vmatpush.bf16.msra.mxu0 %v791
  %827 = vmatmul.bf16.gmra.mxu0 %v796
  %v828 = vpop.f32.mrf.mxu0
  %v829 = vadd.f32 %v744, %v828
  %v830 = vpop.f32.mrf.mxu0
  %v831 = vadd.f32 %v746, %v830
  %832 = vmatmul.bf16.gmra.mxu0 %v799
  %v833 = vpop.f32.mrf.mxu0
  %v834 = vadd.f32 %v749, %v833
  %v835 = vpop.f32.mrf.mxu0
  %v836 = vadd.f32 %v751, %v835
  %837 = vmatmul.bf16.gmra.mxu0 %v802
  %v838 = vpop.f32.mrf.mxu0
  %v839 = vadd.f32 %v754, %v838
  %v840 = vpop.f32.mrf.mxu0
  %v841 = vadd.f32 %v756, %v840
  %842 = vmatmul.bf16.gmra.mxu0 %v805
  %v843 = vpop.f32.mrf.mxu0
  %v844 = vadd.f32 %v759, %v843
  %v845 = vpop.f32.mrf.mxu0
  %v846 = vadd.f32 %v761, %v845
  %847 = vmatmul.bf16.gmra.mxu0 %v808
  %v848 = vpop.f32.mrf.mxu0
  %v849 = vadd.f32 %v764, %v848
  %v850 = vpop.f32.mrf.mxu0
  %v851 = vadd.f32 %v766, %v850
  %852 = vmatmul.bf16.gmra.mxu0 %v811
  %v853 = vpop.f32.mrf.mxu0
  %v854 = vadd.f32 %v769, %v853
  %v855 = vpop.f32.mrf.mxu0
  %v856 = vadd.f32 %v771, %v855
  %857 = vmatmul.bf16.gmra.mxu0 %v814
  %v858 = vpop.f32.mrf.mxu0
  %v859 = vadd.f32 %v774, %v858
  %v860 = vpop.f32.mrf.mxu0
  %v861 = vadd.f32 %v776, %v860
  %862 = vmatmul.bf16.gmra.mxu0 %v817
  %v863 = vpop.f32.mrf.mxu0
  %v864 = vadd.f32 %v779, %v863
  %v865 = vpop.f32.mrf.mxu0
  %v866 = vadd.f32 %v781, %v865
  %867 = vdwg.mxu0
  %v868 = vld [vmem:[%s1 + $0x28] sm:$0xf]
  %v869 = vld [vmem:[%s1 + $0x2c] sm:$0xf]
  %v870 = vld [vmem:[%s1 + $0x30] sm:$0xf]
  %v871 = vld [vmem:[%s1 + $0x34] sm:$0xf]
  %v872 = vpack.c.bf16 %v659, %v658
  %v873 = vpack.c.bf16 %v661, %v660
  %v874 = vpack.c.bf16 %v663, %v662
  %v875 = vpack.c.bf16 %v665, %v664
  %v876 = vpack.c.bf16 %v667, %v666
  %v877 = vpack.c.bf16 %v669, %v668
  %v878 = vpack.c.bf16 %v671, %v670
  %v879 = vpack.c.bf16 %v673, %v672
  %v884 = vunpack.c.l.b16 %v868
  %v885 = vunpack.c.l.b16 %v869
  %v886 = vunpack.c.l.b16 %v870
  %v887 = vunpack.c.l.b16 %v871
  %v888 = vpack.c.b16 %v885, %v884
  %v889 = vpack.c.b16 %v887, %v886
  %v893 = vsel %vm157, %v872, 0
  %v896 = vsel %vm157, %v873, 0
  %v899 = vsel %vm157, %v874, 0
  %v902 = vsel %vm157, %v875, 0
  %v905 = vsel %vm157, %v876, 0
  %v908 = vsel %vm157, %v877, 0
  %v911 = vsel %vm157, %v878, 0
  %v914 = vsel %vm157, %v879, 0
  %916 = vmatpush.bf16.msra.mxu0 0
  %917 = vmatpush.bf16.msra.mxu0 0
  %918 = vmatpush.bf16.msra.mxu0 0
  %919 = vmatpush.bf16.msra.mxu0 0
  %920 = vmatpush.bf16.msra.mxu0 0
  %921 = vmatpush.bf16.msra.mxu0 0
  %922 = vmatpush.bf16.msra.mxu0 %v889
  %923 = vmatpush.bf16.msra.mxu0 %v888
  %924 = vmatmul.bf16.gmra.mxu0 %v893
  %v925 = vpop.f32.mrf.mxu0
  %v926 = vadd.f32 0.0, %v925
  %v927 = vpop.f32.mrf.mxu0
  %v928 = vadd.f32 0.0, %v927
  %929 = vmatmul.bf16.gmra.mxu0 %v896
  %v930 = vpop.f32.mrf.mxu0
  %v931 = vadd.f32 0.0, %v930
  %v932 = vpop.f32.mrf.mxu0
  %v933 = vadd.f32 0.0, %v932
  %934 = vmatmul.bf16.gmra.mxu0 %v899
  %v935 = vpop.f32.mrf.mxu0
  %v936 = vadd.f32 0.0, %v935
  %v937 = vpop.f32.mrf.mxu0
  %v938 = vadd.f32 0.0, %v937
  %939 = vmatmul.bf16.gmra.mxu0 %v902
  %v940 = vpop.f32.mrf.mxu0
  %v941 = vadd.f32 0.0, %v940
  %v942 = vpop.f32.mrf.mxu0
  %v943 = vadd.f32 0.0, %v942
  %944 = vmatmul.bf16.gmra.mxu0 %v905
  %v945 = vpop.f32.mrf.mxu0
  %v946 = vadd.f32 0.0, %v945
  %v947 = vpop.f32.mrf.mxu0
  %v948 = vadd.f32 0.0, %v947
  %949 = vmatmul.bf16.gmra.mxu0 %v908
  %v950 = vpop.f32.mrf.mxu0
  %v951 = vadd.f32 0.0, %v950
  %v952 = vpop.f32.mrf.mxu0
  %v953 = vadd.f32 0.0, %v952
  %954 = vmatmul.bf16.gmra.mxu0 %v911
  %v955 = vpop.f32.mrf.mxu0
  %v956 = vadd.f32 0.0, %v955
  %v957 = vpop.f32.mrf.mxu0
  %v958 = vadd.f32 0.0, %v957
  %959 = vmatmul.bf16.gmra.mxu0 %v914
  %v960 = vpop.f32.mrf.mxu0
  %v961 = vadd.f32 0.0, %v960
  %v962 = vpop.f32.mrf.mxu0
  %v963 = vadd.f32 0.0, %v962
  %964 = vdwg.mxu0
  %v965 = vadd.f32 %v829, %v926
  %v966 = vadd.f32 %v831, %v928
  %v967 = vadd.f32 %v834, %v931
  %v968 = vadd.f32 %v836, %v933
  %v969 = vadd.f32 %v839, %v936
  %v970 = vadd.f32 %v841, %v938
  %v971 = vadd.f32 %v844, %v941
  %v972 = vadd.f32 %v846, %v943
  %v973 = vadd.f32 %v849, %v946
  %v974 = vadd.f32 %v851, %v948
  %v975 = vadd.f32 %v854, %v951
  %v976 = vadd.f32 %v856, %v953
  %v977 = vadd.f32 %v859, %v956
  %v978 = vadd.f32 %v861, %v958
  %v979 = vadd.f32 %v864, %v961
  %v980 = vadd.f32 %v866, %v963
  %v981 = vperm.slane %v15, 3
  %v982 = vadd.f32 %v965, %v981
  %v983 = vadd.f32 %v966, %v981
  %v984 = vadd.f32 %v967, %v981
  %v985 = vadd.f32 %v968, %v981
  %v986 = vadd.f32 %v969, %v981
  %v987 = vadd.f32 %v970, %v981
  %v988 = vadd.f32 %v971, %v981
  %v989 = vadd.f32 %v972, %v981
  %v990 = vadd.f32 %v973, %v981
  %v991 = vadd.f32 %v974, %v981
  %v992 = vadd.f32 %v975, %v981
  %v993 = vadd.f32 %v976, %v981
  %v994 = vadd.f32 %v977, %v981
  %v995 = vadd.f32 %v978, %v981
  %v996 = vadd.f32 %v979, %v981
  %v997 = vadd.f32 %v980, %v981
  %v998 = vsel %vm157, %v982, 0.0
  %999 = vadd.xlane.f32.xlu0 %v998
  %v1000 = vpop.xlane.xlu0 %999
  %v1001 = vsel %vm157, %v983, 0.0
  %1002 = vadd.xlane.f32.xlu0 %v1001
  %v1003 = vpop.xlane.xlu0 %1002
  %v1004 = vsel %vm157, %v984, 0.0
  %1005 = vadd.xlane.f32.xlu0 %v1004
  %v1006 = vpop.xlane.xlu0 %1005
  %v1007 = vsel %vm157, %v985, 0.0
  %1008 = vadd.xlane.f32.xlu0 %v1007
  %v1009 = vpop.xlane.xlu0 %1008
  %v1010 = vsel %vm157, %v986, 0.0
  %1011 = vadd.xlane.f32.xlu0 %v1010
  %v1012 = vpop.xlane.xlu0 %1011
  %v1013 = vsel %vm157, %v987, 0.0
  %1014 = vadd.xlane.f32.xlu0 %v1013
  %v1015 = vpop.xlane.xlu0 %1014
  %v1016 = vsel %vm157, %v988, 0.0
  %1017 = vadd.xlane.f32.xlu0 %v1016
  %v1018 = vpop.xlane.xlu0 %1017
  %v1019 = vsel %vm157, %v989, 0.0
  %1020 = vadd.xlane.f32.xlu0 %v1019
  %v1021 = vpop.xlane.xlu0 %1020
  %v1022 = vsel %vm157, %v990, 0.0
  %1023 = vadd.xlane.f32.xlu0 %v1022
  %v1024 = vpop.xlane.xlu0 %1023
  %v1025 = vsel %vm157, %v991, 0.0
  %1026 = vadd.xlane.f32.xlu0 %v1025
  %v1027 = vpop.xlane.xlu0 %1026
  %v1028 = vsel %vm157, %v992, 0.0
  %1029 = vadd.xlane.f32.xlu0 %v1028
  %v1030 = vpop.xlane.xlu0 %1029
  %v1031 = vsel %vm157, %v993, 0.0
  %1032 = vadd.xlane.f32.xlu0 %v1031
  %v1033 = vpop.xlane.xlu0 %1032
  %v1034 = vsel %vm157, %v994, 0.0
  %1035 = vadd.xlane.f32.xlu0 %v1034
  %v1036 = vpop.xlane.xlu0 %1035
  %v1037 = vsel %vm157, %v995, 0.0
  %1038 = vadd.xlane.f32.xlu0 %v1037
  %v1039 = vpop.xlane.xlu0 %1038
  %v1040 = vsel %vm157, %v996, 0.0
  %1041 = vadd.xlane.f32.xlu0 %v1040
  %v1042 = vpop.xlane.xlu0 %1041
  %v1043 = vsel %vm157, %v997, 0.0
  %1044 = vadd.xlane.f32.xlu0 %v1043
  %v1045 = vpop.xlane.xlu0 %1044
  %v1046 = vmul.f32 %v1000, %v212
  %v1047 = vmul.f32 %v1003, %v212
  %v1048 = vmul.f32 %v1006, %v212
  %v1049 = vmul.f32 %v1009, %v212
  %v1050 = vmul.f32 %v1012, %v212
  %v1051 = vmul.f32 %v1015, %v212
  %v1052 = vmul.f32 %v1018, %v212
  %v1053 = vmul.f32 %v1021, %v212
  %v1054 = vmul.f32 %v1024, %v212
  %v1055 = vmul.f32 %v1027, %v212
  %v1056 = vmul.f32 %v1030, %v212
  %v1057 = vmul.f32 %v1033, %v212
  %v1058 = vmul.f32 %v1036, %v212
  %v1059 = vmul.f32 %v1039, %v212
  %v1060 = vmul.f32 %v1042, %v212
  %v1061 = vmul.f32 %v1045, %v212
  %v1062 = vsub.f32 %v982, %v1046
  %v1063 = vsub.f32 %v983, %v1047
  %v1064 = vsub.f32 %v984, %v1048
  %v1065 = vsub.f32 %v985, %v1049
  %v1066 = vsub.f32 %v986, %v1050
  %v1067 = vsub.f32 %v987, %v1051
  %v1068 = vsub.f32 %v988, %v1052
  %v1069 = vsub.f32 %v989, %v1053
  %v1070 = vsub.f32 %v990, %v1054
  %v1071 = vsub.f32 %v991, %v1055
  %v1072 = vsub.f32 %v992, %v1056
  %v1073 = vsub.f32 %v993, %v1057
  %v1074 = vsub.f32 %v994, %v1058
  %v1075 = vsub.f32 %v995, %v1059
  %v1076 = vsub.f32 %v996, %v1060
  %v1077 = vsub.f32 %v997, %v1061
  %v1078 = vmul.f32 %v1062, %v1062
  %v1079 = vmul.f32 %v1063, %v1063
  %v1080 = vmul.f32 %v1064, %v1064
  %v1081 = vmul.f32 %v1065, %v1065
  %v1082 = vmul.f32 %v1066, %v1066
  %v1083 = vmul.f32 %v1067, %v1067
  %v1084 = vmul.f32 %v1068, %v1068
  %v1085 = vmul.f32 %v1069, %v1069
  %v1086 = vmul.f32 %v1070, %v1070
  %v1087 = vmul.f32 %v1071, %v1071
  %v1088 = vmul.f32 %v1072, %v1072
  %v1089 = vmul.f32 %v1073, %v1073
  %v1090 = vmul.f32 %v1074, %v1074
  %v1091 = vmul.f32 %v1075, %v1075
  %v1092 = vmul.f32 %v1076, %v1076
  %v1093 = vmul.f32 %v1077, %v1077
  %v1094 = vsel %vm157, %v1078, 0.0
  %1095 = vadd.xlane.f32.xlu0 %v1094
  %v1096 = vpop.xlane.xlu0 %1095
  %v1097 = vsel %vm157, %v1079, 0.0
  %1098 = vadd.xlane.f32.xlu0 %v1097
  %v1099 = vpop.xlane.xlu0 %1098
  %v1100 = vsel %vm157, %v1080, 0.0
  %1101 = vadd.xlane.f32.xlu0 %v1100
  %v1102 = vpop.xlane.xlu0 %1101
  %v1103 = vsel %vm157, %v1081, 0.0
  %1104 = vadd.xlane.f32.xlu0 %v1103
  %v1105 = vpop.xlane.xlu0 %1104
  %v1106 = vsel %vm157, %v1082, 0.0
  %1107 = vadd.xlane.f32.xlu0 %v1106
  %v1108 = vpop.xlane.xlu0 %1107
  %v1109 = vsel %vm157, %v1083, 0.0
  %1110 = vadd.xlane.f32.xlu0 %v1109
  %v1111 = vpop.xlane.xlu0 %1110
  %v1112 = vsel %vm157, %v1084, 0.0
  %1113 = vadd.xlane.f32.xlu0 %v1112
  %v1114 = vpop.xlane.xlu0 %1113
  %v1115 = vsel %vm157, %v1085, 0.0
  %1116 = vadd.xlane.f32.xlu0 %v1115
  %v1117 = vpop.xlane.xlu0 %1116
  %v1118 = vsel %vm157, %v1086, 0.0
  %1119 = vadd.xlane.f32.xlu0 %v1118
  %v1120 = vpop.xlane.xlu0 %1119
  %v1121 = vsel %vm157, %v1087, 0.0
  %1122 = vadd.xlane.f32.xlu0 %v1121
  %v1123 = vpop.xlane.xlu0 %1122
  %v1124 = vsel %vm157, %v1088, 0.0
  %1125 = vadd.xlane.f32.xlu0 %v1124
  %v1126 = vpop.xlane.xlu0 %1125
  %v1127 = vsel %vm157, %v1089, 0.0
  %1128 = vadd.xlane.f32.xlu0 %v1127
  %v1129 = vpop.xlane.xlu0 %1128
  %v1130 = vsel %vm157, %v1090, 0.0
  %1131 = vadd.xlane.f32.xlu0 %v1130
  %v1132 = vpop.xlane.xlu0 %1131
  %v1133 = vsel %vm157, %v1091, 0.0
  %1134 = vadd.xlane.f32.xlu0 %v1133
  %v1135 = vpop.xlane.xlu0 %1134
  %v1136 = vsel %vm157, %v1092, 0.0
  %1137 = vadd.xlane.f32.xlu0 %v1136
  %v1138 = vpop.xlane.xlu0 %1137
  %v1139 = vsel %vm157, %v1093, 0.0
  %1140 = vadd.xlane.f32.xlu0 %v1139
  %v1141 = vpop.xlane.xlu0 %1140
  %v1142 = vmul.f32 %v1096, %v212
  %v1143 = vmul.f32 %v1099, %v212
  %v1144 = vmul.f32 %v1102, %v212
  %v1145 = vmul.f32 %v1105, %v212
  %v1146 = vmul.f32 %v1108, %v212
  %v1147 = vmul.f32 %v1111, %v212
  %v1148 = vmul.f32 %v1114, %v212
  %v1149 = vmul.f32 %v1117, %v212
  %v1150 = vmul.f32 %v1120, %v212
  %v1151 = vmul.f32 %v1123, %v212
  %v1152 = vmul.f32 %v1126, %v212
  %v1153 = vmul.f32 %v1129, %v212
  %v1154 = vmul.f32 %v1132, %v212
  %v1155 = vmul.f32 %v1135, %v212
  %v1156 = vmul.f32 %v1138, %v212
  %v1157 = vmul.f32 %v1141, %v212
  %v1158 = vadd.f32 %v1142, 1e-05
  %v1159 = vadd.f32 %v1143, 1e-05
  %v1160 = vadd.f32 %v1144, 1e-05
  %v1161 = vadd.f32 %v1145, 1e-05
  %v1162 = vadd.f32 %v1146, 1e-05
  %v1163 = vadd.f32 %v1147, 1e-05
  %v1164 = vadd.f32 %v1148, 1e-05
  %v1165 = vadd.f32 %v1149, 1e-05
  %v1166 = vadd.f32 %v1150, 1e-05
  %v1167 = vadd.f32 %v1151, 1e-05
  %v1168 = vadd.f32 %v1152, 1e-05
  %v1169 = vadd.f32 %v1153, 1e-05
  %v1170 = vadd.f32 %v1154, 1e-05
  %v1171 = vadd.f32 %v1155, 1e-05
  %v1172 = vadd.f32 %v1156, 1e-05
  %v1173 = vadd.f32 %v1157, 1e-05
  %v1174 = vrsqrt.pop %v1158
  %v1175 = vmul.f32 %v1174, %v1158
  %v1176 = vmul.f32 %v1175, %v1174
  %v1177 = vmul.f32 0.5, %v1176
  %v1178 = vsub.f32 1.5, %v1177
  %v1179 = vmul.f32 %v1174, %v1178
  %vm1180 = vweird.f32 %v1158
  %vm1181 = vweird.f32 %v1174
  %vm1182 = vmor %vm1180, %vm1181
  %v1183 = vsel %vm1182, %v1174, %v1179
  %v1184 = vrsqrt.pop %v1159
  %v1185 = vmul.f32 %v1184, %v1159
  %v1186 = vmul.f32 %v1185, %v1184
  %v1187 = vmul.f32 0.5, %v1186
  %v1188 = vsub.f32 1.5, %v1187
  %v1189 = vmul.f32 %v1184, %v1188
  %vm1190 = vweird.f32 %v1159
  %vm1191 = vweird.f32 %v1184
  %vm1192 = vmor %vm1190, %vm1191
  %v1193 = vsel %vm1192, %v1184, %v1189
  %v1194 = vrsqrt.pop %v1160
  %v1195 = vmul.f32 %v1194, %v1160
  %v1196 = vmul.f32 %v1195, %v1194
  %v1197 = vmul.f32 0.5, %v1196
  %v1198 = vsub.f32 1.5, %v1197
  %v1199 = vmul.f32 %v1194, %v1198
  %vm1200 = vweird.f32 %v1160
  %vm1201 = vweird.f32 %v1194
  %vm1202 = vmor %vm1200, %vm1201
  %v1203 = vsel %vm1202, %v1194, %v1199
  %v1204 = vrsqrt.pop %v1161
  %v1205 = vmul.f32 %v1204, %v1161
  %v1206 = vmul.f32 %v1205, %v1204
  %v1207 = vmul.f32 0.5, %v1206
  %v1208 = vsub.f32 1.5, %v1207
  %v1209 = vmul.f32 %v1204, %v1208
  %vm1210 = vweird.f32 %v1161
  %vm1211 = vweird.f32 %v1204
  %vm1212 = vmor %vm1210, %vm1211
  %v1213 = vsel %vm1212, %v1204, %v1209
  %v1214 = vrsqrt.pop %v1162
  %v1215 = vmul.f32 %v1214, %v1162
  %v1216 = vmul.f32 %v1215, %v1214
  %v1217 = vmul.f32 0.5, %v1216
  %v1218 = vsub.f32 1.5, %v1217
  %v1219 = vmul.f32 %v1214, %v1218
  %vm1220 = vweird.f32 %v1162
  %vm1221 = vweird.f32 %v1214
  %vm1222 = vmor %vm1220, %vm1221
  %v1223 = vsel %vm1222, %v1214, %v1219
  %v1224 = vrsqrt.pop %v1163
  %v1225 = vmul.f32 %v1224, %v1163
  %v1226 = vmul.f32 %v1225, %v1224
  %v1227 = vmul.f32 0.5, %v1226
  %v1228 = vsub.f32 1.5, %v1227
  %v1229 = vmul.f32 %v1224, %v1228
  %vm1230 = vweird.f32 %v1163
  %vm1231 = vweird.f32 %v1224
  %vm1232 = vmor %vm1230, %vm1231
  %v1233 = vsel %vm1232, %v1224, %v1229
  %v1234 = vrsqrt.pop %v1164
  %v1235 = vmul.f32 %v1234, %v1164
  %v1236 = vmul.f32 %v1235, %v1234
  %v1237 = vmul.f32 0.5, %v1236
  %v1238 = vsub.f32 1.5, %v1237
  %v1239 = vmul.f32 %v1234, %v1238
  %vm1240 = vweird.f32 %v1164
  %vm1241 = vweird.f32 %v1234
  %vm1242 = vmor %vm1240, %vm1241
  %v1243 = vsel %vm1242, %v1234, %v1239
  %v1244 = vrsqrt.pop %v1165
  %v1245 = vmul.f32 %v1244, %v1165
  %v1246 = vmul.f32 %v1245, %v1244
  %v1247 = vmul.f32 0.5, %v1246
  %v1248 = vsub.f32 1.5, %v1247
  %v1249 = vmul.f32 %v1244, %v1248
  %vm1250 = vweird.f32 %v1165
  %vm1251 = vweird.f32 %v1244
  %vm1252 = vmor %vm1250, %vm1251
  %v1253 = vsel %vm1252, %v1244, %v1249
  %v1254 = vrsqrt.pop %v1166
  %v1255 = vmul.f32 %v1254, %v1166
  %v1256 = vmul.f32 %v1255, %v1254
  %v1257 = vmul.f32 0.5, %v1256
  %v1258 = vsub.f32 1.5, %v1257
  %v1259 = vmul.f32 %v1254, %v1258
  %vm1260 = vweird.f32 %v1166
  %vm1261 = vweird.f32 %v1254
  %vm1262 = vmor %vm1260, %vm1261
  %v1263 = vsel %vm1262, %v1254, %v1259
  %v1264 = vrsqrt.pop %v1167
  %v1265 = vmul.f32 %v1264, %v1167
  %v1266 = vmul.f32 %v1265, %v1264
  %v1267 = vmul.f32 0.5, %v1266
  %v1268 = vsub.f32 1.5, %v1267
  %v1269 = vmul.f32 %v1264, %v1268
  %vm1270 = vweird.f32 %v1167
  %vm1271 = vweird.f32 %v1264
  %vm1272 = vmor %vm1270, %vm1271
  %v1273 = vsel %vm1272, %v1264, %v1269
  %v1274 = vrsqrt.pop %v1168
  %v1275 = vmul.f32 %v1274, %v1168
  %v1276 = vmul.f32 %v1275, %v1274
  %v1277 = vmul.f32 0.5, %v1276
  %v1278 = vsub.f32 1.5, %v1277
  %v1279 = vmul.f32 %v1274, %v1278
  %vm1280 = vweird.f32 %v1168
  %vm1281 = vweird.f32 %v1274
  %vm1282 = vmor %vm1280, %vm1281
  %v1283 = vsel %vm1282, %v1274, %v1279
  %v1284 = vrsqrt.pop %v1169
  %v1285 = vmul.f32 %v1284, %v1169
  %v1286 = vmul.f32 %v1285, %v1284
  %v1287 = vmul.f32 0.5, %v1286
  %v1288 = vsub.f32 1.5, %v1287
  %v1289 = vmul.f32 %v1284, %v1288
  %vm1290 = vweird.f32 %v1169
  %vm1291 = vweird.f32 %v1284
  %vm1292 = vmor %vm1290, %vm1291
  %v1293 = vsel %vm1292, %v1284, %v1289
  %v1294 = vrsqrt.pop %v1170
  %v1295 = vmul.f32 %v1294, %v1170
  %v1296 = vmul.f32 %v1295, %v1294
  %v1297 = vmul.f32 0.5, %v1296
  %v1298 = vsub.f32 1.5, %v1297
  %v1299 = vmul.f32 %v1294, %v1298
  %vm1300 = vweird.f32 %v1170
  %vm1301 = vweird.f32 %v1294
  %vm1302 = vmor %vm1300, %vm1301
  %v1303 = vsel %vm1302, %v1294, %v1299
  %v1304 = vrsqrt.pop %v1171
  %v1305 = vmul.f32 %v1304, %v1171
  %v1306 = vmul.f32 %v1305, %v1304
  %v1307 = vmul.f32 0.5, %v1306
  %v1308 = vsub.f32 1.5, %v1307
  %v1309 = vmul.f32 %v1304, %v1308
  %vm1310 = vweird.f32 %v1171
  %vm1311 = vweird.f32 %v1304
  %vm1312 = vmor %vm1310, %vm1311
  %v1313 = vsel %vm1312, %v1304, %v1309
  %v1314 = vrsqrt.pop %v1172
  %v1315 = vmul.f32 %v1314, %v1172
  %v1316 = vmul.f32 %v1315, %v1314
  %v1317 = vmul.f32 0.5, %v1316
  %v1318 = vsub.f32 1.5, %v1317
  %v1319 = vmul.f32 %v1314, %v1318
  %vm1320 = vweird.f32 %v1172
  %vm1321 = vweird.f32 %v1314
  %vm1322 = vmor %vm1320, %vm1321
  %v1323 = vsel %vm1322, %v1314, %v1319
  %v1324 = vrsqrt.pop %v1173
  %v1325 = vmul.f32 %v1324, %v1173
  %v1326 = vmul.f32 %v1325, %v1324
  %v1327 = vmul.f32 0.5, %v1326
  %v1328 = vsub.f32 1.5, %v1327
  %v1329 = vmul.f32 %v1324, %v1328
  %vm1330 = vweird.f32 %v1173
  %vm1331 = vweird.f32 %v1324
  %vm1332 = vmor %vm1330, %vm1331
  %v1333 = vsel %vm1332, %v1324, %v1329
  %v1334 = vmul.f32 %v1062, %v1183
  %v1335 = vmul.f32 %v1063, %v1193
  %v1336 = vmul.f32 %v1064, %v1203
  %v1337 = vmul.f32 %v1065, %v1213
  %v1338 = vmul.f32 %v1066, %v1223
  %v1339 = vmul.f32 %v1067, %v1233
  %v1340 = vmul.f32 %v1068, %v1243
  %v1341 = vmul.f32 %v1069, %v1253
  %v1342 = vmul.f32 %v1070, %v1263
  %v1343 = vmul.f32 %v1071, %v1273
  %v1344 = vmul.f32 %v1072, %v1283
  %v1345 = vmul.f32 %v1073, %v1293
  %v1346 = vmul.f32 %v1074, %v1303
  %v1347 = vmul.f32 %v1075, %v1313
  %v1348 = vmul.f32 %v1076, %v1323
  %v1349 = vmul.f32 %v1077, %v1333
  %v1350 = vperm.slane %v15, 4
  %v1351 = vmul.f32 %v1334, %v1350
  %v1352 = vmul.f32 %v1335, %v1350
  %v1353 = vmul.f32 %v1336, %v1350
  %v1354 = vmul.f32 %v1337, %v1350
  %v1355 = vmul.f32 %v1338, %v1350
  %v1356 = vmul.f32 %v1339, %v1350
  %v1357 = vmul.f32 %v1340, %v1350
  %v1358 = vmul.f32 %v1341, %v1350
  %v1359 = vmul.f32 %v1342, %v1350
  %v1360 = vmul.f32 %v1343, %v1350
  %v1361 = vmul.f32 %v1344, %v1350
  %v1362 = vmul.f32 %v1345, %v1350
  %v1363 = vmul.f32 %v1346, %v1350
  %v1364 = vmul.f32 %v1347, %v1350
  %v1365 = vmul.f32 %v1348, %v1350
  %v1366 = vmul.f32 %v1349, %v1350
  %v1367 = vperm.slane %v15, 5
  %v1368 = vadd.f32 %v1351, %v1367
  %v1369 = vadd.f32 %v1352, %v1367
  %v1370 = vadd.f32 %v1353, %v1367
  %v1371 = vadd.f32 %v1354, %v1367
  %v1372 = vadd.f32 %v1355, %v1367
  %v1373 = vadd.f32 %v1356, %v1367
  %v1374 = vadd.f32 %v1357, %v1367
  %v1375 = vadd.f32 %v1358, %v1367
  %v1376 = vadd.f32 %v1359, %v1367
  %v1377 = vadd.f32 %v1360, %v1367
  %v1378 = vadd.f32 %v1361, %v1367
  %v1379 = vadd.f32 %v1362, %v1367
  %v1380 = vadd.f32 %v1363, %v1367
  %v1381 = vadd.f32 %v1364, %v1367
  %v1382 = vadd.f32 %v1365, %v1367
  %v1383 = vadd.f32 %v1366, %v1367
  %1400 = vrot.lane.b32.xlu0 %v982, 96
  %v1401 = vpop.permute.xlu0 %1400
  %1402 = vrot.lane.b32.xlu0 %v983, 96
  %v1403 = vpop.permute.xlu0 %1402
  %1404 = vrot.lane.b32.xlu0 %v984, 96
  %v1405 = vpop.permute.xlu0 %1404
  %1406 = vrot.lane.b32.xlu0 %v985, 96
  %v1407 = vpop.permute.xlu0 %1406
  %1408 = vrot.lane.b32.xlu0 %v986, 96
  %v1409 = vpop.permute.xlu0 %1408
  %1410 = vrot.lane.b32.xlu0 %v987, 96
  %v1411 = vpop.permute.xlu0 %1410
  %1412 = vrot.lane.b32.xlu0 %v988, 96
  %v1413 = vpop.permute.xlu0 %1412
  %1414 = vrot.lane.b32.xlu0 %v989, 96
  %v1415 = vpop.permute.xlu0 %1414
  %1416 = vrot.lane.b32.xlu0 %v990, 96
  %v1417 = vpop.permute.xlu0 %1416
  %1418 = vrot.lane.b32.xlu0 %v991, 96
  %v1419 = vpop.permute.xlu0 %1418
  %1420 = vrot.lane.b32.xlu0 %v992, 96
  %v1421 = vpop.permute.xlu0 %1420
  %1422 = vrot.lane.b32.xlu0 %v993, 96
  %v1423 = vpop.permute.xlu0 %1422
  %1424 = vrot.lane.b32.xlu0 %v994, 96
  %v1425 = vpop.permute.xlu0 %1424
  %1426 = vrot.lane.b32.xlu0 %v995, 96
  %v1427 = vpop.permute.xlu0 %1426
  %1428 = vrot.lane.b32.xlu0 %v996, 96
  %v1429 = vpop.permute.xlu0 %1428
  %1430 = vrot.lane.b32.xlu0 %v997, 96
  %v1431 = vpop.permute.xlu0 %1430
  %v1448 = vsel %vm157, %v1401, 0.0
  %1449 = vadd.xlane.f32.xlu0 %v1448
  %v1450 = vpop.xlane.xlu0 %1449
  %v1451 = vsel %vm157, %v1403, 0.0
  %1452 = vadd.xlane.f32.xlu0 %v1451
  %v1453 = vpop.xlane.xlu0 %1452
  %v1454 = vsel %vm157, %v1405, 0.0
  %1455 = vadd.xlane.f32.xlu0 %v1454
  %v1456 = vpop.xlane.xlu0 %1455
  %v1457 = vsel %vm157, %v1407, 0.0
  %1458 = vadd.xlane.f32.xlu0 %v1457
  %v1459 = vpop.xlane.xlu0 %1458
  %v1460 = vsel %vm157, %v1409, 0.0
  %1461 = vadd.xlane.f32.xlu0 %v1460
  %v1462 = vpop.xlane.xlu0 %1461
  %v1463 = vsel %vm157, %v1411, 0.0
  %1464 = vadd.xlane.f32.xlu0 %v1463
  %v1465 = vpop.xlane.xlu0 %1464
  %v1466 = vsel %vm157, %v1413, 0.0
  %1467 = vadd.xlane.f32.xlu0 %v1466
  %v1468 = vpop.xlane.xlu0 %1467
  %v1469 = vsel %vm157, %v1415, 0.0
  %1470 = vadd.xlane.f32.xlu0 %v1469
  %v1471 = vpop.xlane.xlu0 %1470
  %v1472 = vsel %vm157, %v1417, 0.0
  %1473 = vadd.xlane.f32.xlu0 %v1472
  %v1474 = vpop.xlane.xlu0 %1473
  %v1475 = vsel %vm157, %v1419, 0.0
  %1476 = vadd.xlane.f32.xlu0 %v1475
  %v1477 = vpop.xlane.xlu0 %1476
  %v1478 = vsel %vm157, %v1421, 0.0
  %1479 = vadd.xlane.f32.xlu0 %v1478
  %v1480 = vpop.xlane.xlu0 %1479
  %v1481 = vsel %vm157, %v1423, 0.0
  %1482 = vadd.xlane.f32.xlu0 %v1481
  %v1483 = vpop.xlane.xlu0 %1482
  %v1484 = vsel %vm157, %v1425, 0.0
  %1485 = vadd.xlane.f32.xlu0 %v1484
  %v1486 = vpop.xlane.xlu0 %1485
  %v1487 = vsel %vm157, %v1427, 0.0
  %1488 = vadd.xlane.f32.xlu0 %v1487
  %v1489 = vpop.xlane.xlu0 %1488
  %v1490 = vsel %vm157, %v1429, 0.0
  %1491 = vadd.xlane.f32.xlu0 %v1490
  %v1492 = vpop.xlane.xlu0 %1491
  %v1493 = vsel %vm157, %v1431, 0.0
  %1494 = vadd.xlane.f32.xlu0 %v1493
  %v1495 = vpop.xlane.xlu0 %1494
  %v1496 = vmul.f32 %v1450, %v212
  %v1497 = vmul.f32 %v1453, %v212
  %v1498 = vmul.f32 %v1456, %v212
  %v1499 = vmul.f32 %v1459, %v212
  %v1500 = vmul.f32 %v1462, %v212
  %v1501 = vmul.f32 %v1465, %v212
  %v1502 = vmul.f32 %v1468, %v212
  %v1503 = vmul.f32 %v1471, %v212
  %v1504 = vmul.f32 %v1474, %v212
  %v1505 = vmul.f32 %v1477, %v212
  %v1506 = vmul.f32 %v1480, %v212
  %v1507 = vmul.f32 %v1483, %v212
  %v1508 = vmul.f32 %v1486, %v212
  %v1509 = vmul.f32 %v1489, %v212
  %v1510 = vmul.f32 %v1492, %v212
  %v1511 = vmul.f32 %v1495, %v212
  %v1512 = vsub.f32 %v982, %v1496
  %v1513 = vsub.f32 %v983, %v1497
  %v1514 = vsub.f32 %v984, %v1498
  %v1515 = vsub.f32 %v985, %v1499
  %v1516 = vsub.f32 %v986, %v1500
  %v1517 = vsub.f32 %v987, %v1501
  %v1518 = vsub.f32 %v988, %v1502
  %v1519 = vsub.f32 %v989, %v1503
  %v1520 = vsub.f32 %v990, %v1504
  %v1521 = vsub.f32 %v991, %v1505
  %v1522 = vsub.f32 %v992, %v1506
  %v1523 = vsub.f32 %v993, %v1507
  %v1524 = vsub.f32 %v994, %v1508
  %v1525 = vsub.f32 %v995, %v1509
  %v1526 = vsub.f32 %v996, %v1510
  %v1527 = vsub.f32 %v997, %v1511
  %v1528 = vmul.f32 %v1512, %v1512
  %v1529 = vmul.f32 %v1513, %v1513
  %v1530 = vmul.f32 %v1514, %v1514
  %v1531 = vmul.f32 %v1515, %v1515
  %v1532 = vmul.f32 %v1516, %v1516
  %v1533 = vmul.f32 %v1517, %v1517
  %v1534 = vmul.f32 %v1518, %v1518
  %v1535 = vmul.f32 %v1519, %v1519
  %v1536 = vmul.f32 %v1520, %v1520
  %v1537 = vmul.f32 %v1521, %v1521
  %v1538 = vmul.f32 %v1522, %v1522
  %v1539 = vmul.f32 %v1523, %v1523
  %v1540 = vmul.f32 %v1524, %v1524
  %v1541 = vmul.f32 %v1525, %v1525
  %v1542 = vmul.f32 %v1526, %v1526
  %v1543 = vmul.f32 %v1527, %v1527
  %1560 = vrot.lane.b32.xlu0 %v1528, 96
  %v1561 = vpop.permute.xlu0 %1560
  %1562 = vrot.lane.b32.xlu0 %v1529, 96
  %v1563 = vpop.permute.xlu0 %1562
  %1564 = vrot.lane.b32.xlu0 %v1530, 96
  %v1565 = vpop.permute.xlu0 %1564
  %1566 = vrot.lane.b32.xlu0 %v1531, 96
  %v1567 = vpop.permute.xlu0 %1566
  %1568 = vrot.lane.b32.xlu0 %v1532, 96
  %v1569 = vpop.permute.xlu0 %1568
  %1570 = vrot.lane.b32.xlu0 %v1533, 96
  %v1571 = vpop.permute.xlu0 %1570
  %1572 = vrot.lane.b32.xlu0 %v1534, 96
  %v1573 = vpop.permute.xlu0 %1572
  %1574 = vrot.lane.b32.xlu0 %v1535, 96
  %v1575 = vpop.permute.xlu0 %1574
  %1576 = vrot.lane.b32.xlu0 %v1536, 96
  %v1577 = vpop.permute.xlu0 %1576
  %1578 = vrot.lane.b32.xlu0 %v1537, 96
  %v1579 = vpop.permute.xlu0 %1578
  %1580 = vrot.lane.b32.xlu0 %v1538, 96
  %v1581 = vpop.permute.xlu0 %1580
  %1582 = vrot.lane.b32.xlu0 %v1539, 96
  %v1583 = vpop.permute.xlu0 %1582
  %1584 = vrot.lane.b32.xlu0 %v1540, 96
  %v1585 = vpop.permute.xlu0 %1584
  %1586 = vrot.lane.b32.xlu0 %v1541, 96
  %v1587 = vpop.permute.xlu0 %1586
  %1588 = vrot.lane.b32.xlu0 %v1542, 96
  %v1589 = vpop.permute.xlu0 %1588
  %1590 = vrot.lane.b32.xlu0 %v1543, 96
  %v1591 = vpop.permute.xlu0 %1590
  %v1608 = vsel %vm157, %v1561, 0.0
  %1609 = vadd.xlane.f32.xlu0 %v1608
  %v1610 = vpop.xlane.xlu0 %1609
  %v1611 = vsel %vm157, %v1563, 0.0
  %1612 = vadd.xlane.f32.xlu0 %v1611
  %v1613 = vpop.xlane.xlu0 %1612
  %v1614 = vsel %vm157, %v1565, 0.0
  %1615 = vadd.xlane.f32.xlu0 %v1614
  %v1616 = vpop.xlane.xlu0 %1615
  %v1617 = vsel %vm157, %v1567, 0.0
  %1618 = vadd.xlane.f32.xlu0 %v1617
  %v1619 = vpop.xlane.xlu0 %1618
  %v1620 = vsel %vm157, %v1569, 0.0
  %1621 = vadd.xlane.f32.xlu0 %v1620
  %v1622 = vpop.xlane.xlu0 %1621
  %v1623 = vsel %vm157, %v1571, 0.0
  %1624 = vadd.xlane.f32.xlu0 %v1623
  %v1625 = vpop.xlane.xlu0 %1624
  %v1626 = vsel %vm157, %v1573, 0.0
  %1627 = vadd.xlane.f32.xlu0 %v1626
  %v1628 = vpop.xlane.xlu0 %1627
  %v1629 = vsel %vm157, %v1575, 0.0
  %1630 = vadd.xlane.f32.xlu0 %v1629
  %v1631 = vpop.xlane.xlu0 %1630
  %v1632 = vsel %vm157, %v1577, 0.0
  %1633 = vadd.xlane.f32.xlu0 %v1632
  %v1634 = vpop.xlane.xlu0 %1633
  %v1635 = vsel %vm157, %v1579, 0.0
  %1636 = vadd.xlane.f32.xlu0 %v1635
  %v1637 = vpop.xlane.xlu0 %1636
  %v1638 = vsel %vm157, %v1581, 0.0
  %1639 = vadd.xlane.f32.xlu0 %v1638
  %v1640 = vpop.xlane.xlu0 %1639
  %v1641 = vsel %vm157, %v1583, 0.0
  %1642 = vadd.xlane.f32.xlu0 %v1641
  %v1643 = vpop.xlane.xlu0 %1642
  %v1644 = vsel %vm157, %v1585, 0.0
  %1645 = vadd.xlane.f32.xlu0 %v1644
  %v1646 = vpop.xlane.xlu0 %1645
  %v1647 = vsel %vm157, %v1587, 0.0
  %1648 = vadd.xlane.f32.xlu0 %v1647
  %v1649 = vpop.xlane.xlu0 %1648
  %v1650 = vsel %vm157, %v1589, 0.0
  %1651 = vadd.xlane.f32.xlu0 %v1650
  %v1652 = vpop.xlane.xlu0 %1651
  %v1653 = vsel %vm157, %v1591, 0.0
  %1654 = vadd.xlane.f32.xlu0 %v1653
  %v1655 = vpop.xlane.xlu0 %1654
  %v1656 = vmul.f32 %v1610, %v212
  %v1657 = vmul.f32 %v1613, %v212
  %v1658 = vmul.f32 %v1616, %v212
  %v1659 = vmul.f32 %v1619, %v212
  %v1660 = vmul.f32 %v1622, %v212
  %v1661 = vmul.f32 %v1625, %v212
  %v1662 = vmul.f32 %v1628, %v212
  %v1663 = vmul.f32 %v1631, %v212
  %v1664 = vmul.f32 %v1634, %v212
  %v1665 = vmul.f32 %v1637, %v212
  %v1666 = vmul.f32 %v1640, %v212
  %v1667 = vmul.f32 %v1643, %v212
  %v1668 = vmul.f32 %v1646, %v212
  %v1669 = vmul.f32 %v1649, %v212
  %v1670 = vmul.f32 %v1652, %v212
  %v1671 = vmul.f32 %v1655, %v212
  %v1672 = vadd.f32 %v1656, 1e-05
  %v1673 = vadd.f32 %v1657, 1e-05
  %v1674 = vadd.f32 %v1658, 1e-05
  %v1675 = vadd.f32 %v1659, 1e-05
  %v1676 = vadd.f32 %v1660, 1e-05
  %v1677 = vadd.f32 %v1661, 1e-05
  %v1678 = vadd.f32 %v1662, 1e-05
  %v1679 = vadd.f32 %v1663, 1e-05
  %v1680 = vadd.f32 %v1664, 1e-05
  %v1681 = vadd.f32 %v1665, 1e-05
  %v1682 = vadd.f32 %v1666, 1e-05
  %v1683 = vadd.f32 %v1667, 1e-05
  %v1684 = vadd.f32 %v1668, 1e-05
  %v1685 = vadd.f32 %v1669, 1e-05
  %v1686 = vadd.f32 %v1670, 1e-05
  %v1687 = vadd.f32 %v1671, 1e-05
  %v1688 = vrsqrt.pop %v1672
  %v1689 = vmul.f32 %v1688, %v1672
  %v1690 = vmul.f32 %v1689, %v1688
  %v1691 = vmul.f32 0.5, %v1690
  %v1692 = vsub.f32 1.5, %v1691
  %v1693 = vmul.f32 %v1688, %v1692
  %vm1694 = vweird.f32 %v1672
  %vm1695 = vweird.f32 %v1688
  %vm1696 = vmor %vm1694, %vm1695
  %v1697 = vsel %vm1696, %v1688, %v1693
  %v1698 = vrsqrt.pop %v1673
  %v1699 = vmul.f32 %v1698, %v1673
  %v1700 = vmul.f32 %v1699, %v1698
  %v1701 = vmul.f32 0.5, %v1700
  %v1702 = vsub.f32 1.5, %v1701
  %v1703 = vmul.f32 %v1698, %v1702
  %vm1704 = vweird.f32 %v1673
  %vm1705 = vweird.f32 %v1698
  %vm1706 = vmor %vm1704, %vm1705
  %v1707 = vsel %vm1706, %v1698, %v1703
  %v1708 = vrsqrt.pop %v1674
  %v1709 = vmul.f32 %v1708, %v1674
  %v1710 = vmul.f32 %v1709, %v1708
  %v1711 = vmul.f32 0.5, %v1710
  %v1712 = vsub.f32 1.5, %v1711
  %v1713 = vmul.f32 %v1708, %v1712
  %vm1714 = vweird.f32 %v1674
  %vm1715 = vweird.f32 %v1708
  %vm1716 = vmor %vm1714, %vm1715
  %v1717 = vsel %vm1716, %v1708, %v1713
  %v1718 = vrsqrt.pop %v1675
  %v1719 = vmul.f32 %v1718, %v1675
  %v1720 = vmul.f32 %v1719, %v1718
  %v1721 = vmul.f32 0.5, %v1720
  %v1722 = vsub.f32 1.5, %v1721
  %v1723 = vmul.f32 %v1718, %v1722
  %vm1724 = vweird.f32 %v1675
  %vm1725 = vweird.f32 %v1718
  %vm1726 = vmor %vm1724, %vm1725
  %v1727 = vsel %vm1726, %v1718, %v1723
  %v1728 = vrsqrt.pop %v1676
  %v1729 = vmul.f32 %v1728, %v1676
  %v1730 = vmul.f32 %v1729, %v1728
  %v1731 = vmul.f32 0.5, %v1730
  %v1732 = vsub.f32 1.5, %v1731
  %v1733 = vmul.f32 %v1728, %v1732
  %vm1734 = vweird.f32 %v1676
  %vm1735 = vweird.f32 %v1728
  %vm1736 = vmor %vm1734, %vm1735
  %v1737 = vsel %vm1736, %v1728, %v1733
  %v1738 = vrsqrt.pop %v1677
  %v1739 = vmul.f32 %v1738, %v1677
  %v1740 = vmul.f32 %v1739, %v1738
  %v1741 = vmul.f32 0.5, %v1740
  %v1742 = vsub.f32 1.5, %v1741
  %v1743 = vmul.f32 %v1738, %v1742
  %vm1744 = vweird.f32 %v1677
  %vm1745 = vweird.f32 %v1738
  %vm1746 = vmor %vm1744, %vm1745
  %v1747 = vsel %vm1746, %v1738, %v1743
  %v1748 = vrsqrt.pop %v1678
  %v1749 = vmul.f32 %v1748, %v1678
  %v1750 = vmul.f32 %v1749, %v1748
  %v1751 = vmul.f32 0.5, %v1750
  %v1752 = vsub.f32 1.5, %v1751
  %v1753 = vmul.f32 %v1748, %v1752
  %vm1754 = vweird.f32 %v1678
  %vm1755 = vweird.f32 %v1748
  %vm1756 = vmor %vm1754, %vm1755
  %v1757 = vsel %vm1756, %v1748, %v1753
  %v1758 = vrsqrt.pop %v1679
  %v1759 = vmul.f32 %v1758, %v1679
  %v1760 = vmul.f32 %v1759, %v1758
  %v1761 = vmul.f32 0.5, %v1760
  %v1762 = vsub.f32 1.5, %v1761
  %v1763 = vmul.f32 %v1758, %v1762
  %vm1764 = vweird.f32 %v1679
  %vm1765 = vweird.f32 %v1758
  %vm1766 = vmor %vm1764, %vm1765
  %v1767 = vsel %vm1766, %v1758, %v1763
  %v1768 = vrsqrt.pop %v1680
  %v1769 = vmul.f32 %v1768, %v1680
  %v1770 = vmul.f32 %v1769, %v1768
  %v1771 = vmul.f32 0.5, %v1770
  %v1772 = vsub.f32 1.5, %v1771
  %v1773 = vmul.f32 %v1768, %v1772
  %vm1774 = vweird.f32 %v1680
  %vm1775 = vweird.f32 %v1768
  %vm1776 = vmor %vm1774, %vm1775
  %v1777 = vsel %vm1776, %v1768, %v1773
  %v1778 = vrsqrt.pop %v1681
  %v1779 = vmul.f32 %v1778, %v1681
  %v1780 = vmul.f32 %v1779, %v1778
  %v1781 = vmul.f32 0.5, %v1780
  %v1782 = vsub.f32 1.5, %v1781
  %v1783 = vmul.f32 %v1778, %v1782
  %vm1784 = vweird.f32 %v1681
  %vm1785 = vweird.f32 %v1778
  %vm1786 = vmor %vm1784, %vm1785
  %v1787 = vsel %vm1786, %v1778, %v1783
  %v1788 = vrsqrt.pop %v1682
  %v1789 = vmul.f32 %v1788, %v1682
  %v1790 = vmul.f32 %v1789, %v1788
  %v1791 = vmul.f32 0.5, %v1790
  %v1792 = vsub.f32 1.5, %v1791
  %v1793 = vmul.f32 %v1788, %v1792
  %vm1794 = vweird.f32 %v1682
  %vm1795 = vweird.f32 %v1788
  %vm1796 = vmor %vm1794, %vm1795
  %v1797 = vsel %vm1796, %v1788, %v1793
  %v1798 = vrsqrt.pop %v1683
  %v1799 = vmul.f32 %v1798, %v1683
  %v1800 = vmul.f32 %v1799, %v1798
  %v1801 = vmul.f32 0.5, %v1800
  %v1802 = vsub.f32 1.5, %v1801
  %v1803 = vmul.f32 %v1798, %v1802
  %vm1804 = vweird.f32 %v1683
  %vm1805 = vweird.f32 %v1798
  %vm1806 = vmor %vm1804, %vm1805
  %v1807 = vsel %vm1806, %v1798, %v1803
  %v1808 = vrsqrt.pop %v1684
  %v1809 = vmul.f32 %v1808, %v1684
  %v1810 = vmul.f32 %v1809, %v1808
  %v1811 = vmul.f32 0.5, %v1810
  %v1812 = vsub.f32 1.5, %v1811
  %v1813 = vmul.f32 %v1808, %v1812
  %vm1814 = vweird.f32 %v1684
  %vm1815 = vweird.f32 %v1808
  %vm1816 = vmor %vm1814, %vm1815
  %v1817 = vsel %vm1816, %v1808, %v1813
  %v1818 = vrsqrt.pop %v1685
  %v1819 = vmul.f32 %v1818, %v1685
  %v1820 = vmul.f32 %v1819, %v1818
  %v1821 = vmul.f32 0.5, %v1820
  %v1822 = vsub.f32 1.5, %v1821
  %v1823 = vmul.f32 %v1818, %v1822
  %vm1824 = vweird.f32 %v1685
  %vm1825 = vweird.f32 %v1818
  %vm1826 = vmor %vm1824, %vm1825
  %v1827 = vsel %vm1826, %v1818, %v1823
  %v1828 = vrsqrt.pop %v1686
  %v1829 = vmul.f32 %v1828, %v1686
  %v1830 = vmul.f32 %v1829, %v1828
  %v1831 = vmul.f32 0.5, %v1830
  %v1832 = vsub.f32 1.5, %v1831
  %v1833 = vmul.f32 %v1828, %v1832
  %vm1834 = vweird.f32 %v1686
  %vm1835 = vweird.f32 %v1828
  %vm1836 = vmor %vm1834, %vm1835
  %v1837 = vsel %vm1836, %v1828, %v1833
  %v1838 = vrsqrt.pop %v1687
  %v1839 = vmul.f32 %v1838, %v1687
  %v1840 = vmul.f32 %v1839, %v1838
  %v1841 = vmul.f32 0.5, %v1840
  %v1842 = vsub.f32 1.5, %v1841
  %v1843 = vmul.f32 %v1838, %v1842
  %vm1844 = vweird.f32 %v1687
  %vm1845 = vweird.f32 %v1838
  %vm1846 = vmor %vm1844, %vm1845
  %v1847 = vsel %vm1846, %v1838, %v1843
  %v1848 = vmul.f32 %v1512, %v1697
  %v1849 = vmul.f32 %v1513, %v1707
  %v1850 = vmul.f32 %v1514, %v1717
  %v1851 = vmul.f32 %v1515, %v1727
  %v1852 = vmul.f32 %v1516, %v1737
  %v1853 = vmul.f32 %v1517, %v1747
  %v1854 = vmul.f32 %v1518, %v1757
  %v1855 = vmul.f32 %v1519, %v1767
  %v1856 = vmul.f32 %v1520, %v1777
  %v1857 = vmul.f32 %v1521, %v1787
  %v1858 = vmul.f32 %v1522, %v1797
  %v1859 = vmul.f32 %v1523, %v1807
  %v1860 = vmul.f32 %v1524, %v1817
  %v1861 = vmul.f32 %v1525, %v1827
  %v1862 = vmul.f32 %v1526, %v1837
  %v1863 = vmul.f32 %v1527, %v1847
  %v1864 = vperm.slane %v15, 6
  %1866 = vrot.lane.b32.xlu0 %v1864, 32
  %v1867 = vpop.permute.xlu0 %1866
  %v1869 = vmul.f32 %v1848, %v1867
  %v1870 = vmul.f32 %v1849, %v1867
  %v1871 = vmul.f32 %v1850, %v1867
  %v1872 = vmul.f32 %v1851, %v1867
  %v1873 = vmul.f32 %v1852, %v1867
  %v1874 = vmul.f32 %v1853, %v1867
  %v1875 = vmul.f32 %v1854, %v1867
  %v1876 = vmul.f32 %v1855, %v1867
  %v1877 = vmul.f32 %v1856, %v1867
  %v1878 = vmul.f32 %v1857, %v1867
  %v1879 = vmul.f32 %v1858, %v1867
  %v1880 = vmul.f32 %v1859, %v1867
  %v1881 = vmul.f32 %v1860, %v1867
  %v1882 = vmul.f32 %v1861, %v1867
  %v1883 = vmul.f32 %v1862, %v1867
  %v1884 = vmul.f32 %v1863, %v1867
  %v1885 = vperm.slane %v15, 7
  %1887 = vrot.lane.b32.xlu0 %v1885, 32
  %v1888 = vpop.permute.xlu0 %1887
  %v1890 = vadd.f32 %v1869, %v1888
  %v1891 = vadd.f32 %v1870, %v1888
  %v1892 = vadd.f32 %v1871, %v1888
  %v1893 = vadd.f32 %v1872, %v1888
  %v1894 = vadd.f32 %v1873, %v1888
  %v1895 = vadd.f32 %v1874, %v1888
  %v1896 = vadd.f32 %v1875, %v1888
  %v1897 = vadd.f32 %v1876, %v1888
  %v1898 = vadd.f32 %v1877, %v1888
  %v1899 = vadd.f32 %v1878, %v1888
  %v1900 = vadd.f32 %v1879, %v1888
  %v1901 = vadd.f32 %v1880, %v1888
  %v1902 = vadd.f32 %v1881, %v1888
  %v1903 = vadd.f32 %v1882, %v1888
  %v1904 = vadd.f32 %v1883, %v1888
  %v1905 = vadd.f32 %v1884, %v1888
  %v1906 = vxor.u32 %v1368, 2147483648
  %v1907 = vxor.u32 %v1369, 2147483648
  %v1908 = vxor.u32 %v1370, 2147483648
  %v1909 = vxor.u32 %v1371, 2147483648
  %v1910 = vxor.u32 %v1372, 2147483648
  %v1911 = vxor.u32 %v1373, 2147483648
  %v1912 = vxor.u32 %v1374, 2147483648
  %v1913 = vxor.u32 %v1375, 2147483648
  %v1914 = vxor.u32 %v1376, 2147483648
  %v1915 = vxor.u32 %v1377, 2147483648
  %v1916 = vxor.u32 %v1378, 2147483648
  %v1917 = vxor.u32 %v1379, 2147483648
  %v1918 = vxor.u32 %v1380, 2147483648
  %v1919 = vxor.u32 %v1381, 2147483648
  %v1920 = vxor.u32 %v1382, 2147483648
  %v1921 = vxor.u32 %v1383, 2147483648
  %v1922 = vmul.f32 %v1906, 1.442695
  %v1923 = vpow.pop %v1922
  %v1924 = vmul.f32 %v1907, 1.442695
  %v1925 = vpow.pop %v1924
  %v1926 = vmul.f32 %v1908, 1.442695
  %v1927 = vpow.pop %v1926
  %v1928 = vmul.f32 %v1909, 1.442695
  %v1929 = vpow.pop %v1928
  %v1930 = vmul.f32 %v1910, 1.442695
  %v1931 = vpow.pop %v1930
  %v1932 = vmul.f32 %v1911, 1.442695
  %v1933 = vpow.pop %v1932
  %v1934 = vmul.f32 %v1912, 1.442695
  %v1935 = vpow.pop %v1934
  %v1936 = vmul.f32 %v1913, 1.442695
  %v1937 = vpow.pop %v1936
  %v1938 = vmul.f32 %v1914, 1.442695
  %v1939 = vpow.pop %v1938
  %v1940 = vmul.f32 %v1915, 1.442695
  %v1941 = vpow.pop %v1940
  %v1942 = vmul.f32 %v1916, 1.442695
  %v1943 = vpow.pop %v1942
  %v1944 = vmul.f32 %v1917, 1.442695
  %v1945 = vpow.pop %v1944
  %v1946 = vmul.f32 %v1918, 1.442695
  %v1947 = vpow.pop %v1946
  %v1948 = vmul.f32 %v1919, 1.442695
  %v1949 = vpow.pop %v1948
  %v1950 = vmul.f32 %v1920, 1.442695
  %v1951 = vpow.pop %v1950
  %v1952 = vmul.f32 %v1921, 1.442695
  %v1953 = vpow.pop %v1952
  %v1954 = vadd.f32 %v1923, 1.0
  %v1955 = vadd.f32 %v1925, 1.0
  %v1956 = vadd.f32 %v1927, 1.0
  %v1957 = vadd.f32 %v1929, 1.0
  %v1958 = vadd.f32 %v1931, 1.0
  %v1959 = vadd.f32 %v1933, 1.0
  %v1960 = vadd.f32 %v1935, 1.0
  %v1961 = vadd.f32 %v1937, 1.0
  %v1962 = vadd.f32 %v1939, 1.0
  %v1963 = vadd.f32 %v1941, 1.0
  %v1964 = vadd.f32 %v1943, 1.0
  %v1965 = vadd.f32 %v1945, 1.0
  %v1966 = vadd.f32 %v1947, 1.0
  %v1967 = vadd.f32 %v1949, 1.0
  %v1968 = vadd.f32 %v1951, 1.0
  %v1969 = vadd.f32 %v1953, 1.0
  %v1970 = vrcp.pop %v1954
  %v1971 = vmul.f32 %v1954, %v1970
  %v1972 = vsub.f32 1.0, %v1971
  %v1973 = vmul.f32 %v1970, %v1972
  %v1974 = vadd.f32 %v1970, %v1973
  %vm1975 = vweird.f32 %v1954
  %vm1976 = vweird.f32 %v1970
  %vm1977 = vmor %vm1975, %vm1976
  %v1978 = vsel %vm1977, %v1970, %v1974
  %v1979 = vand.u32 2147483647, %v1954
  %vm1980 = vcmp.eq.f32.partialorder %v1979, 8.507059e+37
  %v1981 = vand.u32 %v1954, 2147483648
  %v1982 = vor.u32 1.1754944e-38, %v1981
  %v1983 = vsel %vm1980, %v1982, %v1978
  %v1984 = vmul.f32 1.0, %v1983
  %v1985 = vrcp.pop %v1955
  %v1986 = vmul.f32 %v1955, %v1985
  %v1987 = vsub.f32 1.0, %v1986
  %v1988 = vmul.f32 %v1985, %v1987
  %v1989 = vadd.f32 %v1985, %v1988
  %vm1990 = vweird.f32 %v1955
  %vm1991 = vweird.f32 %v1985
  %vm1992 = vmor %vm1990, %vm1991
  %v1993 = vsel %vm1992, %v1985, %v1989
  %v1994 = vand.u32 2147483647, %v1955
  %vm1995 = vcmp.eq.f32.partialorder %v1994, 8.507059e+37
  %v1996 = vand.u32 %v1955, 2147483648
  %v1997 = vor.u32 1.1754944e-38, %v1996
  %v1998 = vsel %vm1995, %v1997, %v1993
  %v1999 = vmul.f32 1.0, %v1998
  %v2000 = vrcp.pop %v1956
  %v2001 = vmul.f32 %v1956, %v2000
  %v2002 = vsub.f32 1.0, %v2001
  %v2003 = vmul.f32 %v2000, %v2002
  %v2004 = vadd.f32 %v2000, %v2003
  %vm2005 = vweird.f32 %v1956
  %vm2006 = vweird.f32 %v2000
  %vm2007 = vmor %vm2005, %vm2006
  %v2008 = vsel %vm2007, %v2000, %v2004
  %v2009 = vand.u32 2147483647, %v1956
  %vm2010 = vcmp.eq.f32.partialorder %v2009, 8.507059e+37
  %v2011 = vand.u32 %v1956, 2147483648
  %v2012 = vor.u32 1.1754944e-38, %v2011
  %v2013 = vsel %vm2010, %v2012, %v2008
  %v2014 = vmul.f32 1.0, %v2013
  %v2015 = vrcp.pop %v1957
  %v2016 = vmul.f32 %v1957, %v2015
  %v2017 = vsub.f32 1.0, %v2016
  %v2018 = vmul.f32 %v2015, %v2017
  %v2019 = vadd.f32 %v2015, %v2018
  %vm2020 = vweird.f32 %v1957
  %vm2021 = vweird.f32 %v2015
  %vm2022 = vmor %vm2020, %vm2021
  %v2023 = vsel %vm2022, %v2015, %v2019
  %v2024 = vand.u32 2147483647, %v1957
  %vm2025 = vcmp.eq.f32.partialorder %v2024, 8.507059e+37
  %v2026 = vand.u32 %v1957, 2147483648
  %v2027 = vor.u32 1.1754944e-38, %v2026
  %v2028 = vsel %vm2025, %v2027, %v2023
  %v2029 = vmul.f32 1.0, %v2028
  %v2030 = vrcp.pop %v1958
  %v2031 = vmul.f32 %v1958, %v2030
  %v2032 = vsub.f32 1.0, %v2031
  %v2033 = vmul.f32 %v2030, %v2032
  %v2034 = vadd.f32 %v2030, %v2033
  %vm2035 = vweird.f32 %v1958
  %vm2036 = vweird.f32 %v2030
  %vm2037 = vmor %vm2035, %vm2036
  %v2038 = vsel %vm2037, %v2030, %v2034
  %v2039 = vand.u32 2147483647, %v1958
  %vm2040 = vcmp.eq.f32.partialorder %v2039, 8.507059e+37
  %v2041 = vand.u32 %v1958, 2147483648
  %v2042 = vor.u32 1.1754944e-38, %v2041
  %v2043 = vsel %vm2040, %v2042, %v2038
  %v2044 = vmul.f32 1.0, %v2043
  %v2045 = vrcp.pop %v1959
  %v2046 = vmul.f32 %v1959, %v2045
  %v2047 = vsub.f32 1.0, %v2046
  %v2048 = vmul.f32 %v2045, %v2047
  %v2049 = vadd.f32 %v2045, %v2048
  %vm2050 = vweird.f32 %v1959
  %vm2051 = vweird.f32 %v2045
  %vm2052 = vmor %vm2050, %vm2051
  %v2053 = vsel %vm2052, %v2045, %v2049
  %v2054 = vand.u32 2147483647, %v1959
  %vm2055 = vcmp.eq.f32.partialorder %v2054, 8.507059e+37
  %v2056 = vand.u32 %v1959, 2147483648
  %v2057 = vor.u32 1.1754944e-38, %v2056
  %v2058 = vsel %vm2055, %v2057, %v2053
  %v2059 = vmul.f32 1.0, %v2058
  %v2060 = vrcp.pop %v1960
  %v2061 = vmul.f32 %v1960, %v2060
  %v2062 = vsub.f32 1.0, %v2061
  %v2063 = vmul.f32 %v2060, %v2062
  %v2064 = vadd.f32 %v2060, %v2063
  %vm2065 = vweird.f32 %v1960
  %vm2066 = vweird.f32 %v2060
  %vm2067 = vmor %vm2065, %vm2066
  %v2068 = vsel %vm2067, %v2060, %v2064
  %v2069 = vand.u32 2147483647, %v1960
  %vm2070 = vcmp.eq.f32.partialorder %v2069, 8.507059e+37
  %v2071 = vand.u32 %v1960, 2147483648
  %v2072 = vor.u32 1.1754944e-38, %v2071
  %v2073 = vsel %vm2070, %v2072, %v2068
  %v2074 = vmul.f32 1.0, %v2073
  %v2075 = vrcp.pop %v1961
  %v2076 = vmul.f32 %v1961, %v2075
  %v2077 = vsub.f32 1.0, %v2076
  %v2078 = vmul.f32 %v2075, %v2077
  %v2079 = vadd.f32 %v2075, %v2078
  %vm2080 = vweird.f32 %v1961
  %vm2081 = vweird.f32 %v2075
  %vm2082 = vmor %vm2080, %vm2081
  %v2083 = vsel %vm2082, %v2075, %v2079
  %v2084 = vand.u32 2147483647, %v1961
  %vm2085 = vcmp.eq.f32.partialorder %v2084, 8.507059e+37
  %v2086 = vand.u32 %v1961, 2147483648
  %v2087 = vor.u32 1.1754944e-38, %v2086
  %v2088 = vsel %vm2085, %v2087, %v2083
  %v2089 = vmul.f32 1.0, %v2088
  %v2090 = vrcp.pop %v1962
  %v2091 = vmul.f32 %v1962, %v2090
  %v2092 = vsub.f32 1.0, %v2091
  %v2093 = vmul.f32 %v2090, %v2092
  %v2094 = vadd.f32 %v2090, %v2093
  %vm2095 = vweird.f32 %v1962
  %vm2096 = vweird.f32 %v2090
  %vm2097 = vmor %vm2095, %vm2096
  %v2098 = vsel %vm2097, %v2090, %v2094
  %v2099 = vand.u32 2147483647, %v1962
  %vm2100 = vcmp.eq.f32.partialorder %v2099, 8.507059e+37
  %v2101 = vand.u32 %v1962, 2147483648
  %v2102 = vor.u32 1.1754944e-38, %v2101
  %v2103 = vsel %vm2100, %v2102, %v2098
  %v2104 = vmul.f32 1.0, %v2103
  %v2105 = vrcp.pop %v1963
  %v2106 = vmul.f32 %v1963, %v2105
  %v2107 = vsub.f32 1.0, %v2106
  %v2108 = vmul.f32 %v2105, %v2107
  %v2109 = vadd.f32 %v2105, %v2108
  %vm2110 = vweird.f32 %v1963
  %vm2111 = vweird.f32 %v2105
  %vm2112 = vmor %vm2110, %vm2111
  %v2113 = vsel %vm2112, %v2105, %v2109
  %v2114 = vand.u32 2147483647, %v1963
  %vm2115 = vcmp.eq.f32.partialorder %v2114, 8.507059e+37
  %v2116 = vand.u32 %v1963, 2147483648
  %v2117 = vor.u32 1.1754944e-38, %v2116
  %v2118 = vsel %vm2115, %v2117, %v2113
  %v2119 = vmul.f32 1.0, %v2118
  %v2120 = vrcp.pop %v1964
  %v2121 = vmul.f32 %v1964, %v2120
  %v2122 = vsub.f32 1.0, %v2121
  %v2123 = vmul.f32 %v2120, %v2122
  %v2124 = vadd.f32 %v2120, %v2123
  %vm2125 = vweird.f32 %v1964
  %vm2126 = vweird.f32 %v2120
  %vm2127 = vmor %vm2125, %vm2126
  %v2128 = vsel %vm2127, %v2120, %v2124
  %v2129 = vand.u32 2147483647, %v1964
  %vm2130 = vcmp.eq.f32.partialorder %v2129, 8.507059e+37
  %v2131 = vand.u32 %v1964, 2147483648
  %v2132 = vor.u32 1.1754944e-38, %v2131
  %v2133 = vsel %vm2130, %v2132, %v2128
  %v2134 = vmul.f32 1.0, %v2133
  %v2135 = vrcp.pop %v1965
  %v2136 = vmul.f32 %v1965, %v2135
  %v2137 = vsub.f32 1.0, %v2136
  %v2138 = vmul.f32 %v2135, %v2137
  %v2139 = vadd.f32 %v2135, %v2138
  %vm2140 = vweird.f32 %v1965
  %vm2141 = vweird.f32 %v2135
  %vm2142 = vmor %vm2140, %vm2141
  %v2143 = vsel %vm2142, %v2135, %v2139
  %v2144 = vand.u32 2147483647, %v1965
  %vm2145 = vcmp.eq.f32.partialorder %v2144, 8.507059e+37
  %v2146 = vand.u32 %v1965, 2147483648
  %v2147 = vor.u32 1.1754944e-38, %v2146
  %v2148 = vsel %vm2145, %v2147, %v2143
  %v2149 = vmul.f32 1.0, %v2148
  %v2150 = vrcp.pop %v1966
  %v2151 = vmul.f32 %v1966, %v2150
  %v2152 = vsub.f32 1.0, %v2151
  %v2153 = vmul.f32 %v2150, %v2152
  %v2154 = vadd.f32 %v2150, %v2153
  %vm2155 = vweird.f32 %v1966
  %vm2156 = vweird.f32 %v2150
  %vm2157 = vmor %vm2155, %vm2156
  %v2158 = vsel %vm2157, %v2150, %v2154
  %v2159 = vand.u32 2147483647, %v1966
  %vm2160 = vcmp.eq.f32.partialorder %v2159, 8.507059e+37
  %v2161 = vand.u32 %v1966, 2147483648
  %v2162 = vor.u32 1.1754944e-38, %v2161
  %v2163 = vsel %vm2160, %v2162, %v2158
  %v2164 = vmul.f32 1.0, %v2163
  %v2165 = vrcp.pop %v1967
  %v2166 = vmul.f32 %v1967, %v2165
  %v2167 = vsub.f32 1.0, %v2166
  %v2168 = vmul.f32 %v2165, %v2167
  %v2169 = vadd.f32 %v2165, %v2168
  %vm2170 = vweird.f32 %v1967
  %vm2171 = vweird.f32 %v2165
  %vm2172 = vmor %vm2170, %vm2171
  %v2173 = vsel %vm2172, %v2165, %v2169
  %v2174 = vand.u32 2147483647, %v1967
  %vm2175 = vcmp.eq.f32.partialorder %v2174, 8.507059e+37
  %v2176 = vand.u32 %v1967, 2147483648
  %v2177 = vor.u32 1.1754944e-38, %v2176
  %v2178 = vsel %vm2175, %v2177, %v2173
  %v2179 = vmul.f32 1.0, %v2178
  %v2180 = vrcp.pop %v1968
  %v2181 = vmul.f32 %v1968, %v2180
  %v2182 = vsub.f32 1.0, %v2181
  %v2183 = vmul.f32 %v2180, %v2182
  %v2184 = vadd.f32 %v2180, %v2183
  %vm2185 = vweird.f32 %v1968
  %vm2186 = vweird.f32 %v2180
  %vm2187 = vmor %vm2185, %vm2186
  %v2188 = vsel %vm2187, %v2180, %v2184
  %v2189 = vand.u32 2147483647, %v1968
  %vm2190 = vcmp.eq.f32.partialorder %v2189, 8.507059e+37
  %v2191 = vand.u32 %v1968, 2147483648
  %v2192 = vor.u32 1.1754944e-38, %v2191
  %v2193 = vsel %vm2190, %v2192, %v2188
  %v2194 = vmul.f32 1.0, %v2193
  %v2195 = vrcp.pop %v1969
  %v2196 = vmul.f32 %v1969, %v2195
  %v2197 = vsub.f32 1.0, %v2196
  %v2198 = vmul.f32 %v2195, %v2197
  %v2199 = vadd.f32 %v2195, %v2198
  %vm2200 = vweird.f32 %v1969
  %vm2201 = vweird.f32 %v2195
  %vm2202 = vmor %vm2200, %vm2201
  %v2203 = vsel %vm2202, %v2195, %v2199
  %v2204 = vand.u32 2147483647, %v1969
  %vm2205 = vcmp.eq.f32.partialorder %v2204, 8.507059e+37
  %v2206 = vand.u32 %v1969, 2147483648
  %v2207 = vor.u32 1.1754944e-38, %v2206
  %v2208 = vsel %vm2205, %v2207, %v2203
  %v2209 = vmul.f32 1.0, %v2208
  %2226 = vrot.lane.b32.xlu0 %v535, 32
  %v2227 = vpop.permute.xlu0 %2226
  %2228 = vrot.lane.b32.xlu0 %v536, 32
  %v2229 = vpop.permute.xlu0 %2228
  %2230 = vrot.lane.b32.xlu0 %v537, 32
  %v2231 = vpop.permute.xlu0 %2230
  %2232 = vrot.lane.b32.xlu0 %v538, 32
  %v2233 = vpop.permute.xlu0 %2232
  %2234 = vrot.lane.b32.xlu0 %v539, 32
  %v2235 = vpop.permute.xlu0 %2234
  %2236 = vrot.lane.b32.xlu0 %v540, 32
  %v2237 = vpop.permute.xlu0 %2236
  %2238 = vrot.lane.b32.xlu0 %v541, 32
  %v2239 = vpop.permute.xlu0 %2238
  %2240 = vrot.lane.b32.xlu0 %v542, 32
  %v2241 = vpop.permute.xlu0 %2240
  %2242 = vrot.lane.b32.xlu0 %v543, 32
  %v2243 = vpop.permute.xlu0 %2242
  %2244 = vrot.lane.b32.xlu0 %v544, 32
  %v2245 = vpop.permute.xlu0 %2244
  %2246 = vrot.lane.b32.xlu0 %v545, 32
  %v2247 = vpop.permute.xlu0 %2246
  %2248 = vrot.lane.b32.xlu0 %v546, 32
  %v2249 = vpop.permute.xlu0 %2248
  %2250 = vrot.lane.b32.xlu0 %v547, 32
  %v2251 = vpop.permute.xlu0 %2250
  %2252 = vrot.lane.b32.xlu0 %v548, 32
  %v2253 = vpop.permute.xlu0 %2252
  %2254 = vrot.lane.b32.xlu0 %v549, 32
  %v2255 = vpop.permute.xlu0 %2254
  %2256 = vrot.lane.b32.xlu0 %v550, 32
  %v2257 = vpop.permute.xlu0 %2256
  %v2274 = vsub.f32 %v1890, %v2227
  %v2275 = vsub.f32 %v1891, %v2229
  %v2276 = vsub.f32 %v1892, %v2231
  %v2277 = vsub.f32 %v1893, %v2233
  %v2278 = vsub.f32 %v1894, %v2235
  %v2279 = vsub.f32 %v1895, %v2237
  %v2280 = vsub.f32 %v1896, %v2239
  %v2281 = vsub.f32 %v1897, %v2241
  %v2282 = vsub.f32 %v1898, %v2243
  %v2283 = vsub.f32 %v1899, %v2245
  %v2284 = vsub.f32 %v1900, %v2247
  %v2285 = vsub.f32 %v1901, %v2249
  %v2286 = vsub.f32 %v1902, %v2251
  %v2287 = vsub.f32 %v1903, %v2253
  %v2288 = vsub.f32 %v1904, %v2255
  %v2289 = vsub.f32 %v1905, %v2257
  %2306 = vrot.lane.b32.xlu0 %v2274, 96
  %v2307 = vpop.permute.xlu0 %2306
  %2308 = vrot.lane.b32.xlu0 %v2275, 96
  %v2309 = vpop.permute.xlu0 %2308
  %2310 = vrot.lane.b32.xlu0 %v2276, 96
  %v2311 = vpop.permute.xlu0 %2310
  %2312 = vrot.lane.b32.xlu0 %v2277, 96
  %v2313 = vpop.permute.xlu0 %2312
  %2314 = vrot.lane.b32.xlu0 %v2278, 96
  %v2315 = vpop.permute.xlu0 %2314
  %2316 = vrot.lane.b32.xlu0 %v2279, 96
  %v2317 = vpop.permute.xlu0 %2316
  %2318 = vrot.lane.b32.xlu0 %v2280, 96
  %v2319 = vpop.permute.xlu0 %2318
  %2320 = vrot.lane.b32.xlu0 %v2281, 96
  %v2321 = vpop.permute.xlu0 %2320
  %2322 = vrot.lane.b32.xlu0 %v2282, 96
  %v2323 = vpop.permute.xlu0 %2322
  %2324 = vrot.lane.b32.xlu0 %v2283, 96
  %v2325 = vpop.permute.xlu0 %2324
  %2326 = vrot.lane.b32.xlu0 %v2284, 96
  %v2327 = vpop.permute.xlu0 %2326
  %2328 = vrot.lane.b32.xlu0 %v2285, 96
  %v2329 = vpop.permute.xlu0 %2328
  %2330 = vrot.lane.b32.xlu0 %v2286, 96
  %v2331 = vpop.permute.xlu0 %2330
  %2332 = vrot.lane.b32.xlu0 %v2287, 96
  %v2333 = vpop.permute.xlu0 %2332
  %2334 = vrot.lane.b32.xlu0 %v2288, 96
  %v2335 = vpop.permute.xlu0 %2334
  %2336 = vrot.lane.b32.xlu0 %v2289, 96
  %v2337 = vpop.permute.xlu0 %2336
  %v2354 = vmul.f32 %v1984, %v2307
  %v2355 = vmul.f32 %v1999, %v2309
  %v2356 = vmul.f32 %v2014, %v2311
  %v2357 = vmul.f32 %v2029, %v2313
  %v2358 = vmul.f32 %v2044, %v2315
  %v2359 = vmul.f32 %v2059, %v2317
  %v2360 = vmul.f32 %v2074, %v2319
  %v2361 = vmul.f32 %v2089, %v2321
  %v2362 = vmul.f32 %v2104, %v2323
  %v2363 = vmul.f32 %v2119, %v2325
  %v2364 = vmul.f32 %v2134, %v2327
  %v2365 = vmul.f32 %v2149, %v2329
  %v2366 = vmul.f32 %v2164, %v2331
  %v2367 = vmul.f32 %v2179, %v2333
  %v2368 = vmul.f32 %v2194, %v2335
  %v2369 = vmul.f32 %v2209, %v2337
  %v2370 = vadd.f32 %v535, %v2354
  %v2371 = vadd.f32 %v536, %v2355
  %v2372 = vadd.f32 %v537, %v2356
  %v2373 = vadd.f32 %v538, %v2357
  %v2374 = vadd.f32 %v539, %v2358
  %v2375 = vadd.f32 %v540, %v2359
  %v2376 = vadd.f32 %v541, %v2360
  %v2377 = vadd.f32 %v542, %v2361
  %v2378 = vadd.f32 %v543, %v2362
  %v2379 = vadd.f32 %v544, %v2363
  %v2380 = vadd.f32 %v545, %v2364
  %v2381 = vadd.f32 %v546, %v2365
  %v2382 = vadd.f32 %v547, %v2366
  %v2383 = vadd.f32 %v548, %v2367
  %v2384 = vadd.f32 %v549, %v2368
  %v2385 = vadd.f32 %v550, %v2369
  %v2386 = vsel %vm157, %v2370, 0.0
  %v2387 = vrot.slane %v2386, 4
  %v2388 = vadd.f32 %v2386, %v2387
  %v2389 = vrot.slane %v2388, 2
  %v2390 = vadd.f32 %v2388, %v2389
  %v2391 = vrot.slane %v2390, 1
  %v2392 = vadd.f32 %v2390, %v2391
  %v2393 = vsel %vm157, %v2371, 0.0
  %v2394 = vrot.slane %v2393, 4
  %v2395 = vadd.f32 %v2393, %v2394
  %v2396 = vrot.slane %v2395, 2
  %v2397 = vadd.f32 %v2395, %v2396
  %v2398 = vrot.slane %v2397, 1
  %v2399 = vadd.f32 %v2397, %v2398
  %v2400 = vsel %vm157, %v2372, 0.0
  %v2401 = vrot.slane %v2400, 4
  %v2402 = vadd.f32 %v2400, %v2401
  %v2403 = vrot.slane %v2402, 2
  %v2404 = vadd.f32 %v2402, %v2403
  %v2405 = vrot.slane %v2404, 1
  %v2406 = vadd.f32 %v2404, %v2405
  %v2407 = vsel %vm157, %v2373, 0.0
  %v2408 = vrot.slane %v2407, 4
  %v2409 = vadd.f32 %v2407, %v2408
  %v2410 = vrot.slane %v2409, 2
  %v2411 = vadd.f32 %v2409, %v2410
  %v2412 = vrot.slane %v2411, 1
  %v2413 = vadd.f32 %v2411, %v2412
  %v2414 = vsel %vm157, %v2374, 0.0
  %v2415 = vrot.slane %v2414, 4
  %v2416 = vadd.f32 %v2414, %v2415
  %v2417 = vrot.slane %v2416, 2
  %v2418 = vadd.f32 %v2416, %v2417
  %v2419 = vrot.slane %v2418, 1
  %v2420 = vadd.f32 %v2418, %v2419
  %v2421 = vsel %vm157, %v2375, 0.0
  %v2422 = vrot.slane %v2421, 4
  %v2423 = vadd.f32 %v2421, %v2422
  %v2424 = vrot.slane %v2423, 2
  %v2425 = vadd.f32 %v2423, %v2424
  %v2426 = vrot.slane %v2425, 1
  %v2427 = vadd.f32 %v2425, %v2426
  %v2428 = vsel %vm157, %v2376, 0.0
  %v2429 = vrot.slane %v2428, 4
  %v2430 = vadd.f32 %v2428, %v2429
  %v2431 = vrot.slane %v2430, 2
  %v2432 = vadd.f32 %v2430, %v2431
  %v2433 = vrot.slane %v2432, 1
  %v2434 = vadd.f32 %v2432, %v2433
  %v2435 = vsel %vm157, %v2377, 0.0
  %v2436 = vrot.slane %v2435, 4
  %v2437 = vadd.f32 %v2435, %v2436
  %v2438 = vrot.slane %v2437, 2
  %v2439 = vadd.f32 %v2437, %v2438
  %v2440 = vrot.slane %v2439, 1
  %v2441 = vadd.f32 %v2439, %v2440
  %v2442 = vsel %vm157, %v2378, 0.0
  %v2443 = vrot.slane %v2442, 4
  %v2444 = vadd.f32 %v2442, %v2443
  %v2445 = vrot.slane %v2444, 2
  %v2446 = vadd.f32 %v2444, %v2445
  %v2447 = vrot.slane %v2446, 1
  %v2448 = vadd.f32 %v2446, %v2447
  %v2449 = vsel %vm157, %v2379, 0.0
  %v2450 = vrot.slane %v2449, 4
  %v2451 = vadd.f32 %v2449, %v2450
  %v2452 = vrot.slane %v2451, 2
  %v2453 = vadd.f32 %v2451, %v2452
  %v2454 = vrot.slane %v2453, 1
  %v2455 = vadd.f32 %v2453, %v2454
  %v2456 = vsel %vm157, %v2380, 0.0
  %v2457 = vrot.slane %v2456, 4
  %v2458 = vadd.f32 %v2456, %v2457
  %v2459 = vrot.slane %v2458, 2
  %v2460 = vadd.f32 %v2458, %v2459
  %v2461 = vrot.slane %v2460, 1
  %v2462 = vadd.f32 %v2460, %v2461
  %v2463 = vsel %vm157, %v2381, 0.0
  %v2464 = vrot.slane %v2463, 4
  %v2465 = vadd.f32 %v2463, %v2464
  %v2466 = vrot.slane %v2465, 2
  %v2467 = vadd.f32 %v2465, %v2466
  %v2468 = vrot.slane %v2467, 1
  %v2469 = vadd.f32 %v2467, %v2468
  %v2470 = vsel %vm157, %v2382, 0.0
  %v2471 = vrot.slane %v2470, 4
  %v2472 = vadd.f32 %v2470, %v2471
  %v2473 = vrot.slane %v2472, 2
  %v2474 = vadd.f32 %v2472, %v2473
  %v2475 = vrot.slane %v2474, 1
  %v2476 = vadd.f32 %v2474, %v2475
  %v2477 = vsel %vm157, %v2383, 0.0
  %v2478 = vrot.slane %v2477, 4
  %v2479 = vadd.f32 %v2477, %v2478
  %v2480 = vrot.slane %v2479, 2
  %v2481 = vadd.f32 %v2479, %v2480
  %v2482 = vrot.slane %v2481, 1
  %v2483 = vadd.f32 %v2481, %v2482
  %v2484 = vsel %vm157, %v2384, 0.0
  %v2485 = vrot.slane %v2484, 4
  %v2486 = vadd.f32 %v2484, %v2485
  %v2487 = vrot.slane %v2486, 2
  %v2488 = vadd.f32 %v2486, %v2487
  %v2489 = vrot.slane %v2488, 1
  %v2490 = vadd.f32 %v2488, %v2489
  %v2491 = vsel %vm157, %v2385, 0.0
  %v2492 = vrot.slane %v2491, 4
  %v2493 = vadd.f32 %v2491, %v2492
  %v2494 = vrot.slane %v2493, 2
  %v2495 = vadd.f32 %v2493, %v2494
  %v2496 = vrot.slane %v2495, 1
  %v2497 = vadd.f32 %v2495, %v2496
  %v2498 = vrcp.pop 8.0
  %v2499 = vmul.f32 8.0, %v2498
  %v2500 = vsub.f32 1.0, %v2499
  %v2501 = vmul.f32 %v2498, %v2500
  %v2502 = vadd.f32 %v2498, %v2501
  %vm2503 = vweird.f32 %v2498
  %v2504 = vsel %vm2503, %v2498, %v2502
  %v2505 = vmul.f32 %v2392, %v2504
  %v2506 = vmul.f32 %v2399, %v2504
  %v2507 = vmul.f32 %v2406, %v2504
  %v2508 = vmul.f32 %v2413, %v2504
  %v2509 = vmul.f32 %v2420, %v2504
  %v2510 = vmul.f32 %v2427, %v2504
  %v2511 = vmul.f32 %v2434, %v2504
  %v2512 = vmul.f32 %v2441, %v2504
  %v2513 = vmul.f32 %v2448, %v2504
  %v2514 = vmul.f32 %v2455, %v2504
  %v2515 = vmul.f32 %v2462, %v2504
  %v2516 = vmul.f32 %v2469, %v2504
  %v2517 = vmul.f32 %v2476, %v2504
  %v2518 = vmul.f32 %v2483, %v2504
  %v2519 = vmul.f32 %v2490, %v2504
  %v2520 = vmul.f32 %v2497, %v2504
  %v2521 = vld [vmem:[%s1 + $0x38] sm:$0xf]
  %v2522 = vld [vmem:[%s1 + $0x3c] sm:$0xf]
  %v2523 = vld [vmem:[%s1 + $0x40] sm:$0xf]
  %v2524 = vld [vmem:[%s1 + $0x44] sm:$0xf]
  %v2525 = vpack.c.bf16 %v2505, %v2505
  %v2526 = vpack.c.bf16 %v2506, %v2506
  %v2527 = vpack.c.bf16 %v2507, %v2507
  %v2528 = vpack.c.bf16 %v2508, %v2508
  %v2529 = vpack.c.bf16 %v2509, %v2509
  %v2530 = vpack.c.bf16 %v2510, %v2510
  %v2531 = vpack.c.bf16 %v2511, %v2511
  %v2532 = vpack.c.bf16 %v2512, %v2512
  %v2533 = vpack.c.bf16 %v2513, %v2513
  %v2534 = vpack.c.bf16 %v2514, %v2514
  %v2535 = vpack.c.bf16 %v2515, %v2515
  %v2536 = vpack.c.bf16 %v2516, %v2516
  %v2537 = vpack.c.bf16 %v2517, %v2517
  %v2538 = vpack.c.bf16 %v2518, %v2518
  %v2539 = vpack.c.bf16 %v2519, %v2519
  %v2540 = vpack.c.bf16 %v2520, %v2520
  %v2541 = vperm.slane %v16, 0
  %v2558 = vunpack.c.l.b16 %v2525
  %v2559 = vunpack.c.l.b16 %v2526
  %v2560 = vunpack.c.l.b16 %v2527
  %v2561 = vunpack.c.l.b16 %v2528
  %v2562 = vunpack.c.l.b16 %v2529
  %v2563 = vunpack.c.l.b16 %v2530
  %v2564 = vunpack.c.l.b16 %v2531
  %v2565 = vunpack.c.l.b16 %v2532
  %v2566 = vunpack.c.l.b16 %v2533
  %v2567 = vunpack.c.l.b16 %v2534
  %v2568 = vunpack.c.l.b16 %v2535
  %v2569 = vunpack.c.l.b16 %v2536
  %v2570 = vunpack.c.l.b16 %v2537
  %v2571 = vunpack.c.l.b16 %v2538
  %v2572 = vunpack.c.l.b16 %v2539
  %v2573 = vunpack.c.l.b16 %v2540
  %vm2574 = vcmask 1041409
  %v2575 = vsel %vm2574, %v2559, %v2558
  %vm2576 = vcmask 1042434
  %v2577 = vsel %vm2576, %v2560, %v2575
  %vm2578 = vcmask 1043459
  %v2579 = vsel %vm2578, %v2561, %v2577
  %vm2580 = vcmask 1044484
  %v2581 = vsel %vm2580, %v2562, %v2579
  %vm2582 = vcmask 1045509
  %v2583 = vsel %vm2582, %v2563, %v2581
  %vm2584 = vcmask 1046534
  %v2585 = vsel %vm2584, %v2564, %v2583
  %vm2586 = vcmask 1047559
  %v2587 = vsel %vm2586, %v2565, %v2585
  %v2588 = vsel %vm2574, %v2567, %v2566
  %v2589 = vsel %vm2576, %v2568, %v2588
  %v2590 = vsel %vm2578, %v2569, %v2589
  %v2591 = vsel %vm2580, %v2570, %v2590
  %v2592 = vsel %vm2582, %v2571, %v2591
  %v2593 = vsel %vm2584, %v2572, %v2592
  %v2594 = vsel %vm2586, %v2573, %v2593
  %v2595 = vpack.c.b16 %v2594, %v2587
  %v2600 = vunpack.c.l.b16 %v2521
  %v2601 = vunpack.c.l.b16 %v2522
  %v2602 = vunpack.c.l.b16 %v2523
  %v2603 = vunpack.c.l.b16 %v2524
  %v2604 = vpack.c.b16 %v2601, %v2600
  %v2605 = vpack.c.b16 %v2603, %v2602
  %v2609 = vsel %vm157, %v2595, 0
  %2611 = vmatpush.bf16.msra.mxu0 0
  %2612 = vmatpush.bf16.msra.mxu0 0
  %2613 = vmatpush.bf16.msra.mxu0 0
  %2614 = vmatpush.bf16.msra.mxu0 0
  %2615 = vmatpush.bf16.msra.mxu0 0
  %2616 = vmatpush.bf16.msra.mxu0 0
  %2617 = vmatpush.bf16.msra.mxu0 %v2605
  %2618 = vmatpush.bf16.msra.mxu0 %v2604
  %2619 = vmatmul.bf16.gmra.mxu0 %v2609
  %v2620 = vpop.f32.mrf.mxu0
  %v2621 = vadd.f32 %v2541, %v2620
  %v2622 = vpop.f32.mrf.mxu0
  %v2623 = vadd.f32 %v2541, %v2622
  %2624 = vdwg.mxu0
  %vm2625 = vcmask 523264
  %v2626 = vsel %vm2625, %v2621, 0.0
  %2627 = vadd.xlane.f32.xlu0 %v2626
  %v2628 = vpop.xlane.xlu0 %2627
  %v2629 = vsel %vm2625, %v2623, 0.0
  %2630 = vadd.xlane.f32.xlu0 %v2629
  %v2631 = vpop.xlane.xlu0 %2630
  %v2632 = vrcp.pop 64.0
  %v2633 = vmul.f32 64.0, %v2632
  %v2634 = vsub.f32 1.0, %v2633
  %v2635 = vmul.f32 %v2632, %v2634
  %v2636 = vadd.f32 %v2632, %v2635
  %vm2637 = vweird.f32 %v2632
  %v2638 = vsel %vm2637, %v2632, %v2636
  %v2639 = vmul.f32 %v2628, %v2638
  %v2640 = vmul.f32 %v2631, %v2638
  %v2641 = vsub.f32 %v2621, %v2639
  %v2642 = vsub.f32 %v2623, %v2640
  %v2643 = vmul.f32 %v2641, %v2641
  %v2644 = vmul.f32 %v2642, %v2642
  %v2645 = vsel %vm2625, %v2643, 0.0
  %2646 = vadd.xlane.f32.xlu0 %v2645
  %v2647 = vpop.xlane.xlu0 %2646
  %v2648 = vsel %vm2625, %v2644, 0.0
  %2649 = vadd.xlane.f32.xlu0 %v2648
  %v2650 = vpop.xlane.xlu0 %2649
  %v2651 = vmul.f32 %v2647, %v2638
  %v2652 = vmul.f32 %v2650, %v2638
  %v2653 = vadd.f32 %v2651, 1e-05
  %v2654 = vadd.f32 %v2652, 1e-05
  %v2655 = vrsqrt.pop %v2653
  %v2656 = vmul.f32 %v2655, %v2653
  %v2657 = vmul.f32 %v2656, %v2655
  %v2658 = vmul.f32 0.5, %v2657
  %v2659 = vsub.f32 1.5, %v2658
  %v2660 = vmul.f32 %v2655, %v2659
  %vm2661 = vweird.f32 %v2653
  %vm2662 = vweird.f32 %v2655
  %vm2663 = vmor %vm2661, %vm2662
  %v2664 = vsel %vm2663, %v2655, %v2660
  %v2665 = vrsqrt.pop %v2654
  %v2666 = vmul.f32 %v2665, %v2654
  %v2667 = vmul.f32 %v2666, %v2665
  %v2668 = vmul.f32 0.5, %v2667
  %v2669 = vsub.f32 1.5, %v2668
  %v2670 = vmul.f32 %v2665, %v2669
  %vm2671 = vweird.f32 %v2654
  %vm2672 = vweird.f32 %v2665
  %vm2673 = vmor %vm2671, %vm2672
  %v2674 = vsel %vm2673, %v2665, %v2670
  %v2675 = vmul.f32 %v2641, %v2664
  %v2676 = vmul.f32 %v2642, %v2674
  %v2677 = vperm.slane %v16, 1
  %v2678 = vmul.f32 %v2675, %v2677
  %v2679 = vmul.f32 %v2676, %v2677
  %v2680 = vperm.slane %v16, 2
  %v2681 = vadd.f32 %v2678, %v2680
  %v2682 = vadd.f32 %v2679, %v2680
  %vm2683 = vcmp.gt.f32.partialorder %v2681, 0.0
  %vm2684 = vcmp.gt.f32.partialorder %v2682, 0.0
  %v2685 = vmul.f32 %v2681, 0.05
  %v2686 = vmul.f32 %v2682, 0.05
  %v2687 = vsel %vm2683, %v2681, %v2685
  %v2688 = vsel %vm2684, %v2682, %v2686
  %v2691 = vrot.slane %v2687, 4
  %v2692 = vrot.slane %v2688, 4
  %vm2695 = vcmask 519168
  %v2696 = vsel %vm2695, %v2687, 0.0
  %v2697 = vrot.slane %v2696, 4
  %v2698 = vadd.f32 %v2696, %v2697
  %v2699 = vrot.slane %v2698, 2
  %v2700 = vadd.f32 %v2698, %v2699
  %v2701 = vrot.slane %v2700, 1
  %v2702 = vadd.f32 %v2700, %v2701
  %v2703 = vsel %vm2695, %v2691, 0.0
  %v2704 = vrot.slane %v2703, 4
  %v2705 = vadd.f32 %v2703, %v2704
  %v2706 = vrot.slane %v2705, 2
  %v2707 = vadd.f32 %v2705, %v2706
  %v2708 = vrot.slane %v2707, 1
  %v2709 = vadd.f32 %v2707, %v2708
  %v2710 = vsel %vm2695, %v2688, 0.0
  %v2711 = vrot.slane %v2710, 4
  %v2712 = vadd.f32 %v2710, %v2711
  %v2713 = vrot.slane %v2712, 2
  %v2714 = vadd.f32 %v2712, %v2713
  %v2715 = vrot.slane %v2714, 1
  %v2716 = vadd.f32 %v2714, %v2715
  %v2717 = vsel %vm2695, %v2692, 0.0
  %v2718 = vrot.slane %v2717, 4
  %v2719 = vadd.f32 %v2717, %v2718
  %v2720 = vrot.slane %v2719, 2
  %v2721 = vadd.f32 %v2719, %v2720
  %v2722 = vrot.slane %v2721, 1
  %v2723 = vadd.f32 %v2721, %v2722
  %v2724 = vrcp.pop 4.0
  %v2725 = vmul.f32 4.0, %v2724
  %v2726 = vsub.f32 1.0, %v2725
  %v2727 = vmul.f32 %v2724, %v2726
  %v2728 = vadd.f32 %v2724, %v2727
  %vm2729 = vweird.f32 %v2724
  %v2730 = vsel %vm2729, %v2724, %v2728
  %v2731 = vmul.f32 %v2702, %v2730
  %v2732 = vmul.f32 %v2709, %v2730
  %v2733 = vmul.f32 %v2716, %v2730
  %v2734 = vmul.f32 %v2723, %v2730
  %v2735 = vld [vmem:[%s1 + $0x48] sm:$0xf]
  %v2736 = vld [vmem:[%s1 + $0x4c] sm:$0xf]
  %v2737 = vld [vmem:[%s1 + $0x50] sm:$0xf]
  %v2738 = vld [vmem:[%s1 + $0x54] sm:$0xf]
  %v2739 = vld [vmem:[%s1 + $0x58] sm:$0xf]
  %v2740 = vld [vmem:[%s1 + $0x5c] sm:$0xf]
  %v2741 = vld [vmem:[%s1 + $0x60] sm:$0xf]
  %v2742 = vld [vmem:[%s1 + $0x64] sm:$0xf]
  %v2743 = vpack.c.bf16 %v2731, %v2731
  %v2744 = vpack.c.bf16 %v2732, %v2732
  %v2745 = vpack.c.bf16 %v2733, %v2733
  %v2746 = vpack.c.bf16 %v2734, %v2734
  %v2747 = vperm.slane %v16, 3
  %v2752 = vunpack.c.l.b16 %v2743
  %v2753 = vunpack.c.l.b16 %v2744
  %v2754 = vunpack.c.l.b16 %v2745
  %v2755 = vunpack.c.l.b16 %v2746
  %v2756 = vsel %vm2574, %v2753, %v2752
  %v2757 = vsel %vm2576, %v2754, %v2756
  %v2758 = vsel %vm2578, %v2755, %v2757
  %v2759 = vpack.c.b16 %v2758, %v2758
  %v2768 = vunpack.c.l.b16 %v2735
  %v2769 = vunpack.c.l.b16 %v2736
  %v2770 = vunpack.c.l.b16 %v2737
  %v2771 = vunpack.c.l.b16 %v2738
  %v2772 = vunpack.c.l.b16 %v2739
  %v2773 = vunpack.c.l.b16 %v2740
  %v2774 = vunpack.c.l.b16 %v2741
  %v2775 = vunpack.c.l.b16 %v2742
  %v2776 = vpack.c.b16 %v2769, %v2768
  %v2777 = vpack.c.b16 %v2771, %v2770
  %v2778 = vpack.c.b16 %v2773, %v2772
  %v2779 = vpack.c.b16 %v2775, %v2774
  %v2785 = vsel %vm2625, %v2759, 0
  %2787 = vmatpush.bf16.msra.mxu0 0
  %2788 = vmatpush.bf16.msra.mxu0 0
  %2789 = vmatpush.bf16.msra.mxu0 0
  %2790 = vmatpush.bf16.msra.mxu0 0
  %2791 = vmatpush.bf16.msra.mxu0 %v2779
  %2792 = vmatpush.bf16.msra.mxu0 %v2778
  %2793 = vmatpush.bf16.msra.mxu0 %v2777
  %2794 = vmatpush.bf16.msra.mxu0 %v2776
  %2795 = vmatmul.bf16.gmra.mxu0 %v2785
  %v2796 = vpop.f32.mrf.mxu0
  %v2797 = vadd.f32 %v2747, %v2796
  %v2798 = vpop.f32.mrf.mxu0
  %2799 = vdwg.mxu0
  %vm2800 = vcmask 125952
  %v2801 = vsel %vm2800, %v2797, 0.0
  %2802 = vadd.xlane.f32.xlu0 %v2801
  %v2803 = vpop.xlane.xlu0 %2802
  %v2804 = vrcp.pop 16.0
  %v2805 = vmul.f32 16.0, %v2804
  %v2806 = vsub.f32 1.0, %v2805
  %v2807 = vmul.f32 %v2804, %v2806
  %v2808 = vadd.f32 %v2804, %v2807
  %vm2809 = vweird.f32 %v2804
  %v2810 = vsel %vm2809, %v2804, %v2808
  %v2811 = vmul.f32 %v2803, %v2810
  %v2812 = vsub.f32 %v2797, %v2811
  %v2813 = vmul.f32 %v2812, %v2812
  %v2814 = vsel %vm2800, %v2813, 0.0
  %2815 = vadd.xlane.f32.xlu0 %v2814
  %v2816 = vpop.xlane.xlu0 %2815
  %v2817 = vmul.f32 %v2816, %v2810
  %v2818 = vadd.f32 %v2817, 1e-05
  %v2819 = vrsqrt.pop %v2818
  %v2820 = vmul.f32 %v2819, %v2818
  %v2821 = vmul.f32 %v2820, %v2819
  %v2822 = vmul.f32 0.5, %v2821
  %v2823 = vsub.f32 1.5, %v2822
  %v2824 = vmul.f32 %v2819, %v2823
  %vm2825 = vweird.f32 %v2818
  %vm2826 = vweird.f32 %v2819
  %vm2827 = vmor %vm2825, %vm2826
  %v2828 = vsel %vm2827, %v2819, %v2824
  %v2829 = vmul.f32 %v2812, %v2828
  %v2830 = vperm.slane %v16, 4
  %v2831 = vmul.f32 %v2829, %v2830
  %v2832 = vperm.slane %v16, 5
  %v2833 = vadd.f32 %v2831, %v2832
  %vm2834 = vcmp.gt.f32.partialorder %v2833, 0.0
  %v2835 = vmul.f32 %v2833, 0.05
  %v2836 = vsel %vm2834, %v2833, %v2835
  %v2837 = vld [vmem:[%s1 + $0x68] sm:$0xf]
  %v2838 = vld [vmem:[%s1 + $0x6c] sm:$0xf]
  %v2839 = vpack.c.bf16 %v2836, %v2836
  %v2840 = vperm.slane %v16, 6
  %v2843 = vunpack.c.l.b16 %v2837
  %v2844 = vunpack.c.l.b16 %v2838
  %v2845 = vpack.c.b16 %v2844, %v2843
  %v2848 = vsel %vm83, %v2839, 0
  %2850 = vmatpush.bf16.msra.mxu0 0
  %2851 = vmatpush.bf16.msra.mxu0 0
  %2852 = vmatpush.bf16.msra.mxu0 0
  %2853 = vmatpush.bf16.msra.mxu0 0
  %2854 = vmatpush.bf16.msra.mxu0 0
  %2855 = vmatpush.bf16.msra.mxu0 0
  %2856 = vmatpush.bf16.msra.mxu0 0
  %2857 = vmatpush.bf16.msra.mxu0 %v2845
  %2858 = vmatmul.bf16.gmra.mxu0 %v2848
  %v2859 = vpop.f32.mrf.mxu0
  %v2860 = vadd.f32 %v2840, %v2859
  %v2861 = vpop.f32.mrf.mxu0
  %2862 = vdwg.mxu0
  %vm2863 = vcmask 60416
  %v2864 = vsel %vm2863, %v2860, 0.0
  %2865 = vadd.xlane.f32.xlu0 %v2864
  %v2866 = vpop.xlane.xlu0 %2865
  %v2867 = vmul.f32 %v2866, %v2504
  %v2868 = vsub.f32 %v2860, %v2867
  %v2869 = vmul.f32 %v2868, %v2868
  %v2870 = vsel %vm2863, %v2869, 0.0
  %2871 = vadd.xlane.f32.xlu0 %v2870
  %v2872 = vpop.xlane.xlu0 %2871
  %v2873 = vmul.f32 %v2872, %v2504
  %v2874 = vadd.f32 %v2873, 1e-05
  %v2875 = vrsqrt.pop %v2874
  %v2876 = vmul.f32 %v2875, %v2874
  %v2877 = vmul.f32 %v2876, %v2875
  %v2878 = vmul.f32 0.5, %v2877
  %v2879 = vsub.f32 1.5, %v2878
  %v2880 = vmul.f32 %v2875, %v2879
  %vm2881 = vweird.f32 %v2874
  %vm2882 = vweird.f32 %v2875
  %vm2883 = vmor %vm2881, %vm2882
  %v2884 = vsel %vm2883, %v2875, %v2880
  %v2885 = vmul.f32 %v2868, %v2884
  %v2886 = vperm.slane %v16, 7
  %v2887 = vmul.f32 %v2885, %v2886
  %v2888 = vperm.slane %v17, 0
  %v2889 = vadd.f32 %v2887, %v2888
  %vm2890 = vcmp.gt.f32.partialorder %v2889, 0.0
  %v2891 = vmul.f32 %v2889, 0.05
  %v2892 = vsel %vm2890, %v2889, %v2891
  %v2894 = vrot.slane %v2892, 2
  %vm2896 = vcmask 58368
  %v2897 = vsel %vm2896, %v2892, 0.0
  %v2898 = vrot.slane %v2897, 4
  %v2899 = vadd.f32 %v2897, %v2898
  %v2900 = vrot.slane %v2899, 2
  %v2901 = vadd.f32 %v2899, %v2900
  %v2902 = vrot.slane %v2901, 1
  %v2903 = vadd.f32 %v2901, %v2902
  %v2904 = vsel %vm2896, %v2894, 0.0
  %v2905 = vrot.slane %v2904, 4
  %v2906 = vadd.f32 %v2904, %v2905
  %v2907 = vrot.slane %v2906, 2
  %v2908 = vadd.f32 %v2906, %v2907
  %v2909 = vrot.slane %v2908, 1
  %v2910 = vadd.f32 %v2908, %v2909
  %v2911 = vrcp.pop 2.0
  %v2912 = vmul.f32 2.0, %v2911
  %v2913 = vsub.f32 1.0, %v2912
  %v2914 = vmul.f32 %v2911, %v2913
  %v2915 = vadd.f32 %v2911, %v2914
  %vm2916 = vweird.f32 %v2911
  %v2917 = vsel %vm2916, %v2911, %v2915
  %v2918 = vmul.f32 %v2903, %v2917
  %v2919 = vmul.f32 %v2910, %v2917
  %v2920 = vld [vmem:[%s1 + $0x70] sm:$0xf]
  %v2921 = vpack.c.bf16 %v2918, %v2918
  %v2922 = vpack.c.bf16 %v2919, %v2919
  %v2923 = vperm.slane %v17, 1
  %v2926 = vunpack.c.l.b16 %v2921
  %v2927 = vunpack.c.l.b16 %v2922
  %v2928 = vsel %vm2574, %v2927, %v2926
  %v2929 = vpack.c.b16 %v2928, %v2928
  %vm2930 = vcmask 64512
  %v2932 = vsel %vm2930, %v2929, 0
  %vm2934 = vcmask 1043456
  %v2936 = vsel %vm2934, %v2920, 0
  %2938 = vmatpush.bf16.msra.mxu0 0
  %2939 = vmatpush.bf16.msra.mxu0 0
  %2940 = vmatpush.bf16.msra.mxu0 0
  %2941 = vmatpush.bf16.msra.mxu0 0
  %2942 = vmatpush.bf16.msra.mxu0 0
  %2943 = vmatpush.bf16.msra.mxu0 0
  %2944 = vmatpush.bf16.msra.mxu0 0
  %2945 = vmatpush.bf16.msra.mxu0 %v2936
  %2946 = vmatmul.bf16.gmra.mxu0 %v2932
  %v2947 = vpop.f32.mrf.mxu0
  %v2948 = vadd.f32 %v2923, %v2947
  %v2949 = vpop.f32.mrf.mxu0
  %2950 = vdwg.mxu0
  %v2951 = vxor.u32 %v2948, 2147483648
  %v2952 = vmul.f32 %v2951, 1.442695
  %v2953 = vpow.pop %v2952
  %v2954 = vadd.f32 %v2953, 1.0
  %v2955 = vrcp.pop %v2954
  %v2956 = vmul.f32 %v2954, %v2955
  %v2957 = vsub.f32 1.0, %v2956
  %v2958 = vmul.f32 %v2955, %v2957
  %v2959 = vadd.f32 %v2955, %v2958
  %vm2960 = vweird.f32 %v2954
  %vm2961 = vweird.f32 %v2955
  %vm2962 = vmor %vm2960, %vm2961
  %v2963 = vsel %vm2962, %v2955, %v2959
  %v2964 = vand.u32 2147483647, %v2954
  %vm2965 = vcmp.eq.f32.partialorder %v2964, 8.507059e+37
  %v2966 = vand.u32 %v2954, 2147483648
  %v2967 = vor.u32 1.1754944e-38, %v2966
  %v2968 = vsel %vm2965, %v2967, %v2963
  %v2969 = vmul.f32 1.0, %v2968
  %v2971 = vrot.slane %v2969, 1
  %vm2973 = vcmask 0
  %2974 = vst.msk [vmem:[%s3] sm:$0x1] %vm2973, %v2969
  %2975 = vst.msk [vmem:[%s3 + $0x1] sm:$0x1] %vm2973, %v2971
  // Predicated region
  $region14: #{tpu_custom_call.1} parent=0 // pred_check
    _
  $region15: #{tpu_custom_call.1} parent=0 // pred_check_branch
    %2977 = sbr.rel (0) target = $region17
  $region16: #{tpu_custom_call.1} parent=0 // pred_region
    _
  $region17: #{tpu_custom_call.1} parent=0 // pred_fallthru
    _
  // Predicated region
  $region18: #{tpu_custom_call.1} parent=0 // pred_check
    _
  $region19: #{tpu_custom_call.1} parent=0 // pred_check_branch
    %2979 = sbr.rel (0) target = $region21
  $region20: #{tpu_custom_call.1} parent=0 // pred_region
    _
  $region21: #{tpu_custom_call.1} parent=0 // pred_fallthru
    _

</llo_original>
